<compile_context>
chip_gen: v6e
topology: v6e:2x2x1
jax: 0.10.0
libtpu: 0.0.40
codegen_flags: <defaults>
</compile_context>

<pallas_src>
import jax
import jax.numpy as jnp
from jax.experimental import pallas as pl
from jax.experimental.pallas import tpu as pltpu


BN_EPS = 1e-5


def _fused_kernel(x_ref, gate_ref, w_ref, gamma_ref, beta_ref, o_ref):
    # x_ref:     (Cin, HW)   flattened NCHW activations (N == 1)
    # gate_ref:  (1, Cin)    pre-sigmoid SE gate
    # w_ref:     (Cout, Cin) 1x1 conv weight
    # gamma_ref: (Cout, 1)   BN scale
    # beta_ref:  (Cout, 1)   BN shift
    # o_ref:     (Cout, HW)
    x = x_ref[...].astype(jnp.float32)
    w = w_ref[...].astype(jnp.float32)

    # Fold the SE gate into the small weight: (Cout, Cin) * (1, Cin)
    gate = jax.nn.sigmoid(gate_ref[...].astype(jnp.float32))        # (1, Cin)
    w_eff = w * gate                                                # (Cout, Cin)

    # 1x1 conv as a single plain MXU matmul: (Cout, Cin) @ (Cin, HW)
    y = jnp.dot(w_eff, x, preferred_element_type=jnp.float32)       # (Cout, HW)

    # BatchNorm2d (training mode): per-channel batch mean / biased variance.
    # Two-pass (shifted) variance for numerical robustness; N == 1 so the
    # reduction count is just HW.
    inv_cnt = jnp.float32(1.0) / jnp.float32(y.shape[1])
    mean = jnp.sum(y, axis=1, keepdims=True) * inv_cnt              # (Cout, 1)
    yc = y - mean
    var = jnp.sum(yc * yc, axis=1, keepdims=True) * inv_cnt         # (Cout, 1)
    inv = jax.lax.rsqrt(var + jnp.float32(BN_EPS))

    scale = gamma_ref[...].astype(jnp.float32) * inv                # (Cout, 1)
    o_ref[...] = (yc * scale + beta_ref[...].astype(jnp.float32)).astype(o_ref.dtype)


def fused_sigmoid_mul_conv_bn(x210, x214, conv_w, bn_gamma, bn_beta):
    """x210: (1, Cin, H, W), x214: (1, Cin, 1, 1), conv_w: (Cout, Cin, 1, 1)."""
    n, cin, h, w = x210.shape
    cout = conv_w.shape[0]
    hw = h * w
    assert n == 1, "kernel specialized to the module's N=1 input (see TODO)"

    # All pure reshapes (no transposes, no extra HBM traffic) because N == 1.
    x_flat = x210.reshape(cin, hw)             # (Cin, HW)
    gate = x214.reshape(1, cin)                # (1, Cin)
    w_mat = conv_w.reshape(cout, cin)          # (Cout, Cin)
    gamma = bn_gamma.reshape(cout, 1)          # (Cout, 1)
    beta = bn_beta.reshape(cout, 1)            # (Cout, 1)

    itemsize = 4
    cost = pl.CostEstimate(
        flops=2 * cout * cin * hw,
        transcendentals=cin + cout,            # sigmoid gate + rsqrt per channel
        bytes_accessed=(x_flat.size + gate.size + w_mat.size
                        + gamma.size + beta.size + cout * hw) * itemsize,
    )

    vmem = pl.BlockSpec(memory_space=pltpu.MemorySpace.VMEM)
    out_flat = pl.pallas_call(
        _fused_kernel,
        out_shape=jax.ShapeDtypeStruct((cout, hw), x210.dtype),
        in_specs=[vmem, vmem, vmem, vmem, vmem],
        out_specs=vmem,
        cost_estimate=cost,
    )(x_flat, gate, w_mat, gamma, beta)

    # (Cout, HW) -> (1, Cout, H, W) is again a pure reshape.
    return out_flat.reshape(1, cout, h, w)


def _reference(x210, x214, conv_w, bn_gamma, bn_beta):
    gate = jax.nn.sigmoid(x214)
    xg = x210 * gate
    y = jnp.einsum('nchw,oc->nohw', xg,
                   conv_w.reshape(conv_w.shape[0], conv_w.shape[1]))
    mean = jnp.mean(y, axis=(0, 2, 3), keepdims=True)
    var = jnp.mean((y - mean) ** 2, axis=(0, 2, 3), keepdims=True)
    inv = jax.lax.rsqrt(var + BN_EPS)
    return (y - mean) * inv * bn_gamma.reshape(1, -1, 1, 1) + bn_beta.reshape(1, -1, 1, 1)


if __name__ == "__main__":
    N, CIN, H, W = 1, 432, 28, 28
    COUT = 72

    key = jax.random.PRNGKey(0)
    k1, k2, k3, k4, k5 = jax.random.split(key, 5)

    x210 = jax.random.normal(k1, (N, CIN, H, W), dtype=jnp.float32)
    x214 = jax.random.normal(k2, (N, CIN, 1, 1), dtype=jnp.float32)

    # Deterministic parameter init (synthetic; shapes match the PyTorch module)
    conv_w = 0.05 * jax.random.normal(k3, (COUT, CIN, 1, 1), dtype=jnp.float32)
    bn_gamma = 1.0 + 0.1 * jax.random.normal(k4, (COUT,), dtype=jnp.float32)
    bn_beta = 0.1 * jax.random.normal(k5, (COUT,), dtype=jnp.float32)

    out = fused_sigmoid_mul_conv_bn(x210, x214, conv_w, bn_gamma, bn_beta)
    out = jax.block_until_ready(out)

    ref = _reference(x210, x214, conv_w, bn_gamma, bn_beta)
    assert out.shape == (N, COUT, H, W), out.shape
    assert jnp.allclose(out, ref, atol=1e-3, rtol=1e-3), float(jnp.max(jnp.abs(out - ref)))

    print("KERNEL_OK")
</pallas_src>

<mosaic_0001>
module attributes {stable_mosaic.version = 11 : i64} {
  func.func @_fused_kernel(%arg0: memref<432x784xf32, #tpu.memory_space<vmem>>, %arg1: memref<1x432xf32, #tpu.memory_space<vmem>>, %arg2: memref<72x432xf32, #tpu.memory_space<vmem>>, %arg3: memref<72x1xf32, #tpu.memory_space<vmem>>, %arg4: memref<72x1xf32, #tpu.memory_space<vmem>>, %arg5: memref<72x784xf32, #tpu.memory_space<vmem>>) attributes {dimension_semantics = [], scalar_prefetch = 0 : i64, scratch_operands = 0 : i64, tpu.core_type = #tpu.core_type<tc>} {
    %c0 = arith.constant 0 : index
    %c0_0 = arith.constant 0 : index
    %0 = vector.load %arg0[%c0, %c0_0] : memref<432x784xf32, #tpu.memory_space<vmem>>, vector<432x784xf32>
    %c0_1 = arith.constant 0 : index
    %c0_2 = arith.constant 0 : index
    %1 = vector.load %arg2[%c0_1, %c0_2] : memref<72x432xf32, #tpu.memory_space<vmem>>, vector<72x432xf32>
    %c0_3 = arith.constant 0 : index
    %c0_4 = arith.constant 0 : index
    %2 = vector.load %arg1[%c0_3, %c0_4] : memref<1x432xf32, #tpu.memory_space<vmem>>, vector<1x432xf32>
    %3 = arith.negf %2 : vector<1x432xf32>
    %4 = math.exp %3 : vector<1x432xf32>
    %cst = arith.constant 1.000000e+00 : f32
    %5 = vector.broadcast %cst : f32 to vector<1x432xf32>
    %6 = arith.addf %5, %4 : vector<1x432xf32>
    %7 = arith.divf %5, %6 : vector<1x432xf32>
    %8 = vector.broadcast %7 : vector<1x432xf32> to vector<72x432xf32>
    %9 = arith.mulf %1, %8 : vector<72x432xf32>
    %cst_5 = arith.constant dense<0.000000e+00> : vector<72x784xf32>
    %10 = tpu.matmul %9, %0, %cst_5 {dimension_numbers = #tpu.dot_dimension_numbers<[1], [0], [0], [1], [0, 0, 1, 1], [], []>} : vector<72x432xf32>, vector<432x784xf32>, vector<72x784xf32> -> vector<72x784xf32>
    %cst_6 = arith.constant 1.000000e+00 : f32
    %cst_7 = arith.constant 7.840000e+02 : f32
    %11 = arith.divf %cst_6, %cst_7 : f32
    %cst_8 = arith.constant dense<0.000000e+00> : vector<72xf32>
    %12 = vector.multi_reduction <add>, %10, %cst_8 [1] : vector<72x784xf32> to vector<72xf32>
    %13 = vector.shape_cast %12 : vector<72xf32> to vector<72x1xf32>
    %14 = vector.broadcast %11 : f32 to vector<72x1xf32>
    %15 = arith.mulf %13, %14 : vector<72x1xf32>
    %16 = vector.broadcast %15 : vector<72x1xf32> to vector<72x784xf32>
    %17 = arith.subf %10, %16 : vector<72x784xf32>
    %18 = arith.mulf %17, %17 : vector<72x784xf32>
    %cst_9 = arith.constant dense<0.000000e+00> : vector<72xf32>
    %19 = vector.multi_reduction <add>, %18, %cst_9 [1] : vector<72x784xf32> to vector<72xf32>
    %20 = vector.shape_cast %19 : vector<72xf32> to vector<72x1xf32>
    %21 = vector.broadcast %11 : f32 to vector<72x1xf32>
    %22 = arith.mulf %20, %21 : vector<72x1xf32>
    %cst_10 = arith.constant 9.99999974E-6 : f32
    %23 = vector.broadcast %cst_10 : f32 to vector<72x1xf32>
    %24 = arith.addf %22, %23 : vector<72x1xf32>
    %25 = math.rsqrt %24 : vector<72x1xf32>
    %c0_11 = arith.constant 0 : index
    %c0_12 = arith.constant 0 : index
    %26 = vector.load %arg3[%c0_11, %c0_12] : memref<72x1xf32, #tpu.memory_space<vmem>>, vector<72x1xf32>
    %27 = arith.mulf %26, %25 : vector<72x1xf32>
    %28 = vector.broadcast %27 : vector<72x1xf32> to vector<72x784xf32>
    %29 = arith.mulf %17, %28 : vector<72x784xf32>
    %c0_13 = arith.constant 0 : index
    %c0_14 = arith.constant 0 : index
    %30 = vector.load %arg4[%c0_13, %c0_14] : memref<72x1xf32, #tpu.memory_space<vmem>>, vector<72x1xf32>
    %31 = vector.broadcast %30 : vector<72x1xf32> to vector<72x784xf32>
    %32 = arith.addf %29, %31 : vector<72x784xf32>
    %c0_15 = arith.constant 0 : index
    %c0_16 = arith.constant 0 : index
    %33 = vector.load %arg5[%c0_15, %c0_16] : memref<72x784xf32, #tpu.memory_space<vmem>>, vector<72x784xf32>
    tpu.vector_store %arg5[%c0_15, %c0_16], %32 {strides = array<i32>} : memref<72x784xf32, #tpu.memory_space<vmem>>, vector<72x784xf32>,
    return
  }
}

</mosaic_0001>

<llo_original>
// kernel: tpu_custom_call.1
$region0: #{tpu_custom_call.1}
  #allocation0 [shape = 'u32[]', space=smem, size = 0x4, offset = 0x4, fixed_abs, tag = 'smem constant byte address 0x4 - core index']
  #allocation1 [shape = 'u32[144,128]{1,0:T(1,128)}', space=vmem, size = 0x12000, scoped, tag = 'internal scratch']
  %s0 = inlined_call_operand.hbm [shape: f32[432,784], index: 0, kind: input, shape index: {}]
  %s1 = inlined_call_operand.hbm [shape: f32[1,432], index: 1, kind: input, shape index: {}]
  %s2 = inlined_call_operand.hbm [shape: f32[72,432], index: 2, kind: input, shape index: {}]
  %s3 = inlined_call_operand.vmem [shape: f32[72,1], index: 3, kind: input, shape index: {}]
  %s4 = inlined_call_operand.vmem [shape: f32[72,1], index: 4, kind: input, shape index: {}]
  %s5 = inlined_call_operand.hbm [shape: f32[72,784], index: 5, kind: output, shape index: {}]
  %s6 = sld [smem:[#allocation0]]
  $region42: #{tpu_custom_call.1} parent=0
    _
  %s8 = ssub.s32 1, %s6
  %s9 = scalar_select 0, %s8, %s6
  $region1: #{tpu_custom_call.1} parent=0
    #allocation2 [shape = 'u8[1548288]{0}', space=vmem, size = 0x17a000, scoped, tag = 'input window, operand 0, single buffered']
    #allocation3 [shape = 's32[1]{0}', space=sflag, size = 0x4, scoped, tag = 'scoped memory for tpu_custom_call.1']
    #allocation4 [shape = 's32[1]{0}', space=sflag, size = 0x4, scoped, tag = 'scoped memory for tpu_custom_call.1']
    #allocation5 [shape = 'u8[2048]{0}', space=vmem, size = 0x800, scoped, tag = 'input window, operand 1, single buffered']
    #allocation6 [shape = 's32[1]{0}', space=sflag, size = 0x4, scoped, tag = 'scoped memory for tpu_custom_call.1']
    #allocation7 [shape = 'u8[147456]{0}', space=vmem, size = 0x24000, scoped, tag = 'input window, operand 2, single buffered']
    #allocation8 [shape = 'u8[258048]{0}', space=vmem, size = 0x3f000, scoped, tag = 'output window, operand 0, single buffered']
    %10 = vsyncpa [#allocation3], 0
    %11 = vsyncpa [#allocation6], 0
    %12 = vsyncpa [#allocation4], 0
    // Predicated region
    $region2: #{tpu_custom_call.1} parent=1 // pred_check
      _
    $region3: #{tpu_custom_call.1} parent=1 // pred_check_branch
      %14 = sbr.rel (0) target = $region5
    $region4: #{tpu_custom_call.1} parent=1 // pred_region
      %s16 = ssub.s32 48384, 48384
      %17 = vsyncadd [#allocation3], %s16
      %s18 = sshll.u32 [#allocation2], 4
      %s19 = int_to_ptr.vmem [resolvable:$true] %s18
      %24 = dma.hbm_to_vmem [thread:$0]  %s0, 48384, %s19, [#allocation3], 896, 896, 56
    $region5: #{tpu_custom_call.1} parent=1 // pred_fallthru
      _
    // Predicated region
    $region6: #{tpu_custom_call.1} parent=1 // pred_check
      _
    $region7: #{tpu_custom_call.1} parent=1 // pred_check_branch
      %26 = sbr.rel (0) target = $region9
    $region8: #{tpu_custom_call.1} parent=1 // pred_region
      %s28 = ssub.s32 64, 64
      %29 = vsyncadd [#allocation6], %s28
      %s31 = sshll.u32 [#allocation5], 4
      %s32 = int_to_ptr.vmem [resolvable:$true] %s31
      %34 = dma.hbm_to_vmem [thread:$0]  %s1, 64, %s32, [#allocation6]
    $region9: #{tpu_custom_call.1} parent=1 // pred_fallthru
      _
    // Predicated region
    $region10: #{tpu_custom_call.1} parent=1 // pred_check
      _
    $region11: #{tpu_custom_call.1} parent=1 // pred_check_branch
      %36 = sbr.rel (0) target = $region13
    $region12: #{tpu_custom_call.1} parent=1 // pred_region
      %s38 = ssub.s32 4608, 4608
      %39 = vsyncadd [#allocation6], %s38
      %s40 = sshll.u32 [#allocation7], 4
      %s41 = int_to_ptr.vmem [resolvable:$true] %s40
      %46 = dma.hbm_to_vmem [thread:$0]  %s2, 4608, %s41, [#allocation6], 512, 512, 32
    $region13: #{tpu_custom_call.1} parent=1 // pred_fallthru
      _
    // Predicated region
    $region14: #{tpu_custom_call.1} parent=1 // pred_check
      _
    $region15: #{tpu_custom_call.1} parent=1 // pred_check_branch
      %48 = sbr.rel (0) target = $region17
    $region16: #{tpu_custom_call.1} parent=1 // pred_region
      _
    $region17: #{tpu_custom_call.1} parent=1 // pred_fallthru
      _
    // Predicated region
    $region18: #{tpu_custom_call.1} parent=1 // pred_check
      _
    $region19: #{tpu_custom_call.1} parent=1 // pred_check_branch
      %50 = sbr.rel (0) target = $region21
    $region20: #{tpu_custom_call.1} parent=1 // pred_region
      _
    $region21: #{tpu_custom_call.1} parent=1 // pred_fallthru
      _
    // Predicated region
    $region22: #{tpu_custom_call.1} parent=1 // pred_check
      _
    $region23: #{tpu_custom_call.1} parent=1 // pred_check_branch
      %52 = sbr.rel (0) target = $region25
    $region24: #{tpu_custom_call.1} parent=1 // pred_region
      %53 = dma.done [#allocation3], 48384
    $region25: #{tpu_custom_call.1} parent=1 // pred_fallthru
      _
    // Predicated region
    $region26: #{tpu_custom_call.1} parent=1 // pred_check
      _
    $region27: #{tpu_custom_call.1} parent=1 // pred_check_branch
      %55 = sbr.rel (0) target = $region29
    $region28: #{tpu_custom_call.1} parent=1 // pred_region
      %56 = dma.done [#allocation6], 64
    $region29: #{tpu_custom_call.1} parent=1 // pred_fallthru
      _
    // Predicated region
    $region30: #{tpu_custom_call.1} parent=1 // pred_check
      _
    $region31: #{tpu_custom_call.1} parent=1 // pred_check_branch
      %58 = sbr.rel (0) target = $region33
    $region32: #{tpu_custom_call.1} parent=1 // pred_region
      %59 = dma.done [#allocation6], 4608
    $region33: #{tpu_custom_call.1} parent=1 // pred_fallthru
      _
    %v60 = vld [vmem:[#allocation2] sm:$0xff]
    %v61 = vld [vmem:[#allocation2 + $0x8] sm:$0xff]
    %v62 = vld [vmem:[#allocation2 + $0x10] sm:$0xff]
    %v63 = vld [vmem:[#allocation2 + $0x18] sm:$0xff]
    %v64 = vld [vmem:[#allocation2 + $0x20] sm:$0xff]
    %v65 = vld [vmem:[#allocation2 + $0x28] sm:$0xff]
    %v66 = vld [vmem:[#allocation2 + $0x30] sm:$0xff]
    %v67 = vld [vmem:[#allocation2 + $0x38] sm:$0xff]
    %v68 = vld [vmem:[#allocation2 + $0x40] sm:$0xff]
    %v69 = vld [vmem:[#allocation2 + $0x48] sm:$0xff]
    %v70 = vld [vmem:[#allocation2 + $0x50] sm:$0xff]
    %v71 = vld [vmem:[#allocation2 + $0x58] sm:$0xff]
    %v72 = vld [vmem:[#allocation2 + $0x60] sm:$0xff]
    %v73 = vld [vmem:[#allocation2 + $0x68] sm:$0xff]
    %v74 = vld [vmem:[#allocation2 + $0x70] sm:$0xff]
    %v75 = vld [vmem:[#allocation2 + $0x78] sm:$0xff]
    %v76 = vld [vmem:[#allocation2 + $0x80] sm:$0xff]
    %v77 = vld [vmem:[#allocation2 + $0x88] sm:$0xff]
    %v78 = vld [vmem:[#allocation2 + $0x90] sm:$0xff]
    %v79 = vld [vmem:[#allocation2 + $0x98] sm:$0xff]
    %v80 = vld [vmem:[#allocation2 + $0xa0] sm:$0xff]
    %v81 = vld [vmem:[#allocation2 + $0xa8] sm:$0xff]
    %v82 = vld [vmem:[#allocation2 + $0xb0] sm:$0xff]
    %v83 = vld [vmem:[#allocation2 + $0xb8] sm:$0xff]
    %v84 = vld [vmem:[#allocation2 + $0xc0] sm:$0xff]
    %v85 = vld [vmem:[#allocation2 + $0xc8] sm:$0xff]
    %v86 = vld [vmem:[#allocation2 + $0xd0] sm:$0xff]
    %v87 = vld [vmem:[#allocation2 + $0xd8] sm:$0xff]
    %v88 = vld [vmem:[#allocation2 + $0xe0] sm:$0xff]
    %v89 = vld [vmem:[#allocation2 + $0xe8] sm:$0xff]
    %v90 = vld [vmem:[#allocation2 + $0xf0] sm:$0xff]
    %v91 = vld [vmem:[#allocation2 + $0xf8] sm:$0xff]
    %v92 = vld [vmem:[#allocation2 + $0x100] sm:$0xff]
    %v93 = vld [vmem:[#allocation2 + $0x108] sm:$0xff]
    %v94 = vld [vmem:[#allocation2 + $0x110] sm:$0xff]
    %v95 = vld [vmem:[#allocation2 + $0x118] sm:$0xff]
    %v96 = vld [vmem:[#allocation2 + $0x120] sm:$0xff]
    %v97 = vld [vmem:[#allocation2 + $0x128] sm:$0xff]
    %v98 = vld [vmem:[#allocation2 + $0x130] sm:$0xff]
    %v99 = vld [vmem:[#allocation2 + $0x138] sm:$0xff]
    %v100 = vld [vmem:[#allocation2 + $0x140] sm:$0xff]
    %v101 = vld [vmem:[#allocation2 + $0x148] sm:$0xff]
    %v102 = vld [vmem:[#allocation2 + $0x150] sm:$0xff]
    %v103 = vld [vmem:[#allocation2 + $0x158] sm:$0xff]
    %v104 = vld [vmem:[#allocation2 + $0x160] sm:$0xff]
    %v105 = vld [vmem:[#allocation2 + $0x168] sm:$0xff]
    %v106 = vld [vmem:[#allocation2 + $0x170] sm:$0xff]
    %v107 = vld [vmem:[#allocation2 + $0x178] sm:$0xff]
    %v108 = vld [vmem:[#allocation2 + $0x180] sm:$0xff]
    %v109 = vld [vmem:[#allocation2 + $0x188] sm:$0xff]
    %v110 = vld [vmem:[#allocation2 + $0x190] sm:$0xff]
    %v111 = vld [vmem:[#allocation2 + $0x198] sm:$0xff]
    %v112 = vld [vmem:[#allocation2 + $0x1a0] sm:$0xff]
    %v113 = vld [vmem:[#allocation2 + $0x1a8] sm:$0xff]
    %v114 = vld [vmem:[#allocation2 + $0x1b0] sm:$0xff]
    %v115 = vld [vmem:[#allocation2 + $0x1b8] sm:$0xff]
    %v116 = vld [vmem:[#allocation2 + $0x1c0] sm:$0xff]
    %v117 = vld [vmem:[#allocation2 + $0x1c8] sm:$0xff]
    %v118 = vld [vmem:[#allocation2 + $0x1d0] sm:$0xff]
    %v119 = vld [vmem:[#allocation2 + $0x1d8] sm:$0xff]
    %v120 = vld [vmem:[#allocation2 + $0x1e0] sm:$0xff]
    %v121 = vld [vmem:[#allocation2 + $0x1e8] sm:$0xff]
    %v122 = vld [vmem:[#allocation2 + $0x1f0] sm:$0xff]
    %v123 = vld [vmem:[#allocation2 + $0x1f8] sm:$0xff]
    %v124 = vld [vmem:[#allocation2 + $0x200] sm:$0xff]
    %v125 = vld [vmem:[#allocation2 + $0x208] sm:$0xff]
    %v126 = vld [vmem:[#allocation2 + $0x210] sm:$0xff]
    %v127 = vld [vmem:[#allocation2 + $0x218] sm:$0xff]
    %v128 = vld [vmem:[#allocation2 + $0x220] sm:$0xff]
    %v129 = vld [vmem:[#allocation2 + $0x228] sm:$0xff]
    %v130 = vld [vmem:[#allocation2 + $0x230] sm:$0xff]
    %v131 = vld [vmem:[#allocation2 + $0x238] sm:$0xff]
    %v132 = vld [vmem:[#allocation2 + $0x240] sm:$0xff]
    %v133 = vld [vmem:[#allocation2 + $0x248] sm:$0xff]
    %v134 = vld [vmem:[#allocation2 + $0x250] sm:$0xff]
    %v135 = vld [vmem:[#allocation2 + $0x258] sm:$0xff]
    %v136 = vld [vmem:[#allocation2 + $0x260] sm:$0xff]
    %v137 = vld [vmem:[#allocation2 + $0x268] sm:$0xff]
    %v138 = vld [vmem:[#allocation2 + $0x270] sm:$0xff]
    %v139 = vld [vmem:[#allocation2 + $0x278] sm:$0xff]
    %v140 = vld [vmem:[#allocation2 + $0x280] sm:$0xff]
    %v141 = vld [vmem:[#allocation2 + $0x288] sm:$0xff]
    %v142 = vld [vmem:[#allocation2 + $0x290] sm:$0xff]
    %v143 = vld [vmem:[#allocation2 + $0x298] sm:$0xff]
    %v144 = vld [vmem:[#allocation2 + $0x2a0] sm:$0xff]
    %v145 = vld [vmem:[#allocation2 + $0x2a8] sm:$0xff]
    %v146 = vld [vmem:[#allocation2 + $0x2b0] sm:$0xff]
    %v147 = vld [vmem:[#allocation2 + $0x2b8] sm:$0xff]
    %v148 = vld [vmem:[#allocation2 + $0x2c0] sm:$0xff]
    %v149 = vld [vmem:[#allocation2 + $0x2c8] sm:$0xff]
    %v150 = vld [vmem:[#allocation2 + $0x2d0] sm:$0xff]
    %v151 = vld [vmem:[#allocation2 + $0x2d8] sm:$0xff]
    %v152 = vld [vmem:[#allocation2 + $0x2e0] sm:$0xff]
    %v153 = vld [vmem:[#allocation2 + $0x2e8] sm:$0xff]
    %v154 = vld [vmem:[#allocation2 + $0x2f0] sm:$0xff]
    %v155 = vld [vmem:[#allocation2 + $0x2f8] sm:$0xff]
    %v156 = vld [vmem:[#allocation2 + $0x300] sm:$0xff]
    %v157 = vld [vmem:[#allocation2 + $0x308] sm:$0xff]
    %v158 = vld [vmem:[#allocation2 + $0x310] sm:$0xff]
    %v159 = vld [vmem:[#allocation2 + $0x318] sm:$0xff]
    %v160 = vld [vmem:[#allocation2 + $0x320] sm:$0xff]
    %v161 = vld [vmem:[#allocation2 + $0x328] sm:$0xff]
    %v162 = vld [vmem:[#allocation2 + $0x330] sm:$0xff]
    %v163 = vld [vmem:[#allocation2 + $0x338] sm:$0xff]
    %v164 = vld [vmem:[#allocation2 + $0x340] sm:$0xff]
    %v165 = vld [vmem:[#allocation2 + $0x348] sm:$0xff]
    %v166 = vld [vmem:[#allocation2 + $0x350] sm:$0xff]
    %v167 = vld [vmem:[#allocation2 + $0x358] sm:$0xff]
    %v168 = vld [vmem:[#allocation2 + $0x360] sm:$0xff]
    %v169 = vld [vmem:[#allocation2 + $0x368] sm:$0xff]
    %v170 = vld [vmem:[#allocation2 + $0x370] sm:$0xff]
    %v171 = vld [vmem:[#allocation2 + $0x378] sm:$0xff]
    %v172 = vld [vmem:[#allocation2 + $0x380] sm:$0xff]
    %v173 = vld [vmem:[#allocation2 + $0x388] sm:$0xff]
    %v174 = vld [vmem:[#allocation2 + $0x390] sm:$0xff]
    %v175 = vld [vmem:[#allocation2 + $0x398] sm:$0xff]
    %v176 = vld [vmem:[#allocation2 + $0x3a0] sm:$0xff]
    %v177 = vld [vmem:[#allocation2 + $0x3a8] sm:$0xff]
    %v178 = vld [vmem:[#allocation2 + $0x3b0] sm:$0xff]
    %v179 = vld [vmem:[#allocation2 + $0x3b8] sm:$0xff]
    %v180 = vld [vmem:[#allocation2 + $0x3c0] sm:$0xff]
    %v181 = vld [vmem:[#allocation2 + $0x3c8] sm:$0xff]
    %v182 = vld [vmem:[#allocation2 + $0x3d0] sm:$0xff]
    %v183 = vld [vmem:[#allocation2 + $0x3d8] sm:$0xff]
    %v184 = vld [vmem:[#allocation2 + $0x3e0] sm:$0xff]
    %v185 = vld [vmem:[#allocation2 + $0x3e8] sm:$0xff]
    %v186 = vld [vmem:[#allocation2 + $0x3f0] sm:$0xff]
    %v187 = vld [vmem:[#allocation2 + $0x3f8] sm:$0xff]
    %v188 = vld [vmem:[#allocation2 + $0x400] sm:$0xff]
    %v189 = vld [vmem:[#allocation2 + $0x408] sm:$0xff]
    %v190 = vld [vmem:[#allocation2 + $0x410] sm:$0xff]
    %v191 = vld [vmem:[#allocation2 + $0x418] sm:$0xff]
    %v192 = vld [vmem:[#allocation2 + $0x420] sm:$0xff]
    %v193 = vld [vmem:[#allocation2 + $0x428] sm:$0xff]
    %v194 = vld [vmem:[#allocation2 + $0x430] sm:$0xff]
    %v195 = vld [vmem:[#allocation2 + $0x438] sm:$0xff]
    %v196 = vld [vmem:[#allocation2 + $0x440] sm:$0xff]
    %v197 = vld [vmem:[#allocation2 + $0x448] sm:$0xff]
    %v198 = vld [vmem:[#allocation2 + $0x450] sm:$0xff]
    %v199 = vld [vmem:[#allocation2 + $0x458] sm:$0xff]
    %v200 = vld [vmem:[#allocation2 + $0x460] sm:$0xff]
    %v201 = vld [vmem:[#allocation2 + $0x468] sm:$0xff]
    %v202 = vld [vmem:[#allocation2 + $0x470] sm:$0xff]
    %v203 = vld [vmem:[#allocation2 + $0x478] sm:$0xff]
    %v204 = vld [vmem:[#allocation2 + $0x480] sm:$0xff]
    %v205 = vld [vmem:[#allocation2 + $0x488] sm:$0xff]
    %v206 = vld [vmem:[#allocation2 + $0x490] sm:$0xff]
    %v207 = vld [vmem:[#allocation2 + $0x498] sm:$0xff]
    %v208 = vld [vmem:[#allocation2 + $0x4a0] sm:$0xff]
    %v209 = vld [vmem:[#allocation2 + $0x4a8] sm:$0xff]
    %v210 = vld [vmem:[#allocation2 + $0x4b0] sm:$0xff]
    %v211 = vld [vmem:[#allocation2 + $0x4b8] sm:$0xff]
    %v212 = vld [vmem:[#allocation2 + $0x4c0] sm:$0xff]
    %v213 = vld [vmem:[#allocation2 + $0x4c8] sm:$0xff]
    %v214 = vld [vmem:[#allocation2 + $0x4d0] sm:$0xff]
    %v215 = vld [vmem:[#allocation2 + $0x4d8] sm:$0xff]
    %v216 = vld [vmem:[#allocation2 + $0x4e0] sm:$0xff]
    %v217 = vld [vmem:[#allocation2 + $0x4e8] sm:$0xff]
    %v218 = vld [vmem:[#allocation2 + $0x4f0] sm:$0xff]
    %v219 = vld [vmem:[#allocation2 + $0x4f8] sm:$0xff]
    %v220 = vld [vmem:[#allocation2 + $0x500] sm:$0xff]
    %v221 = vld [vmem:[#allocation2 + $0x508] sm:$0xff]
    %v222 = vld [vmem:[#allocation2 + $0x510] sm:$0xff]
    %v223 = vld [vmem:[#allocation2 + $0x518] sm:$0xff]
    %v224 = vld [vmem:[#allocation2 + $0x520] sm:$0xff]
    %v225 = vld [vmem:[#allocation2 + $0x528] sm:$0xff]
    %v226 = vld [vmem:[#allocation2 + $0x530] sm:$0xff]
    %v227 = vld [vmem:[#allocation2 + $0x538] sm:$0xff]
    %v228 = vld [vmem:[#allocation2 + $0x540] sm:$0xff]
    %v229 = vld [vmem:[#allocation2 + $0x548] sm:$0xff]
    %v230 = vld [vmem:[#allocation2 + $0x550] sm:$0xff]
    %v231 = vld [vmem:[#allocation2 + $0x558] sm:$0xff]
    %v232 = vld [vmem:[#allocation2 + $0x560] sm:$0xff]
    %v233 = vld [vmem:[#allocation2 + $0x568] sm:$0xff]
    %v234 = vld [vmem:[#allocation2 + $0x570] sm:$0xff]
    %v235 = vld [vmem:[#allocation2 + $0x578] sm:$0xff]
    %v236 = vld [vmem:[#allocation2 + $0x580] sm:$0xff]
    %v237 = vld [vmem:[#allocation2 + $0x588] sm:$0xff]
    %v238 = vld [vmem:[#allocation2 + $0x590] sm:$0xff]
    %v239 = vld [vmem:[#allocation2 + $0x598] sm:$0xff]
    %v240 = vld [vmem:[#allocation2 + $0x5a0] sm:$0xff]
    %v241 = vld [vmem:[#allocation2 + $0x5a8] sm:$0xff]
    %v242 = vld [vmem:[#allocation2 + $0x5b0] sm:$0xff]
    %v243 = vld [vmem:[#allocation2 + $0x5b8] sm:$0xff]
    %v244 = vld [vmem:[#allocation2 + $0x5c0] sm:$0xff]
    %v245 = vld [vmem:[#allocation2 + $0x5c8] sm:$0xff]
    %v246 = vld [vmem:[#allocation2 + $0x5d0] sm:$0xff]
    %v247 = vld [vmem:[#allocation2 + $0x5d8] sm:$0xff]
    %v248 = vld [vmem:[#allocation2 + $0x5e0] sm:$0xff]
    %v249 = vld [vmem:[#allocation2 + $0x5e8] sm:$0xff]
    %v250 = vld [vmem:[#allocation2 + $0x5f0] sm:$0xff]
    %v251 = vld [vmem:[#allocation2 + $0x5f8] sm:$0xff]
    %v252 = vld [vmem:[#allocation2 + $0x600] sm:$0xff]
    %v253 = vld [vmem:[#allocation2 + $0x608] sm:$0xff]
    %v254 = vld [vmem:[#allocation2 + $0x610] sm:$0xff]
    %v255 = vld [vmem:[#allocation2 + $0x618] sm:$0xff]
    %v256 = vld [vmem:[#allocation2 + $0x620] sm:$0xff]
    %v257 = vld [vmem:[#allocation2 + $0x628] sm:$0xff]
    %v258 = vld [vmem:[#allocation2 + $0x630] sm:$0xff]
    %v259 = vld [vmem:[#allocation2 + $0x638] sm:$0xff]
    %v260 = vld [vmem:[#allocation2 + $0x640] sm:$0xff]
    %v261 = vld [vmem:[#allocation2 + $0x648] sm:$0xff]
    %v262 = vld [vmem:[#allocation2 + $0x650] sm:$0xff]
    %v263 = vld [vmem:[#allocation2 + $0x658] sm:$0xff]
    %v264 = vld [vmem:[#allocation2 + $0x660] sm:$0xff]
    %v265 = vld [vmem:[#allocation2 + $0x668] sm:$0xff]
    %v266 = vld [vmem:[#allocation2 + $0x670] sm:$0xff]
    %v267 = vld [vmem:[#allocation2 + $0x678] sm:$0xff]
    %v268 = vld [vmem:[#allocation2 + $0x680] sm:$0xff]
    %v269 = vld [vmem:[#allocation2 + $0x688] sm:$0xff]
    %v270 = vld [vmem:[#allocation2 + $0x690] sm:$0xff]
    %v271 = vld [vmem:[#allocation2 + $0x698] sm:$0xff]
    %v272 = vld [vmem:[#allocation2 + $0x6a0] sm:$0xff]
    %v273 = vld [vmem:[#allocation2 + $0x6a8] sm:$0xff]
    %v274 = vld [vmem:[#allocation2 + $0x6b0] sm:$0xff]
    %v275 = vld [vmem:[#allocation2 + $0x6b8] sm:$0xff]
    %v276 = vld [vmem:[#allocation2 + $0x6c0] sm:$0xff]
    %v277 = vld [vmem:[#allocation2 + $0x6c8] sm:$0xff]
    %v278 = vld [vmem:[#allocation2 + $0x6d0] sm:$0xff]
    %v279 = vld [vmem:[#allocation2 + $0x6d8] sm:$0xff]
    %v280 = vld [vmem:[#allocation2 + $0x6e0] sm:$0xff]
    %v281 = vld [vmem:[#allocation2 + $0x6e8] sm:$0xff]
    %v282 = vld [vmem:[#allocation2 + $0x6f0] sm:$0xff]
    %v283 = vld [vmem:[#allocation2 + $0x6f8] sm:$0xff]
    %v284 = vld [vmem:[#allocation2 + $0x700] sm:$0xff]
    %v285 = vld [vmem:[#allocation2 + $0x708] sm:$0xff]
    %v286 = vld [vmem:[#allocation2 + $0x710] sm:$0xff]
    %v287 = vld [vmem:[#allocation2 + $0x718] sm:$0xff]
    %v288 = vld [vmem:[#allocation2 + $0x720] sm:$0xff]
    %v289 = vld [vmem:[#allocation2 + $0x728] sm:$0xff]
    %v290 = vld [vmem:[#allocation2 + $0x730] sm:$0xff]
    %v291 = vld [vmem:[#allocation2 + $0x738] sm:$0xff]
    %v292 = vld [vmem:[#allocation2 + $0x740] sm:$0xff]
    %v293 = vld [vmem:[#allocation2 + $0x748] sm:$0xff]
    %v294 = vld [vmem:[#allocation2 + $0x750] sm:$0xff]
    %v295 = vld [vmem:[#allocation2 + $0x758] sm:$0xff]
    %v296 = vld [vmem:[#allocation2 + $0x760] sm:$0xff]
    %v297 = vld [vmem:[#allocation2 + $0x768] sm:$0xff]
    %v298 = vld [vmem:[#allocation2 + $0x770] sm:$0xff]
    %v299 = vld [vmem:[#allocation2 + $0x778] sm:$0xff]
    %v300 = vld [vmem:[#allocation2 + $0x780] sm:$0xff]
    %v301 = vld [vmem:[#allocation2 + $0x788] sm:$0xff]
    %v302 = vld [vmem:[#allocation2 + $0x790] sm:$0xff]
    %v303 = vld [vmem:[#allocation2 + $0x798] sm:$0xff]
    %v304 = vld [vmem:[#allocation2 + $0x7a0] sm:$0xff]
    %v305 = vld [vmem:[#allocation2 + $0x7a8] sm:$0xff]
    %v306 = vld [vmem:[#allocation2 + $0x7b0] sm:$0xff]
    %v307 = vld [vmem:[#allocation2 + $0x7b8] sm:$0xff]
    %v308 = vld [vmem:[#allocation2 + $0x7c0] sm:$0xff]
    %v309 = vld [vmem:[#allocation2 + $0x7c8] sm:$0xff]
    %v310 = vld [vmem:[#allocation2 + $0x7d0] sm:$0xff]
    %v311 = vld [vmem:[#allocation2 + $0x7d8] sm:$0xff]
    %v312 = vld [vmem:[#allocation2 + $0x7e0] sm:$0xff]
    %v313 = vld [vmem:[#allocation2 + $0x7e8] sm:$0xff]
    %v314 = vld [vmem:[#allocation2 + $0x7f0] sm:$0xff]
    %v315 = vld [vmem:[#allocation2 + $0x7f8] sm:$0xff]
    %v316 = vld [vmem:[#allocation2 + $0x800] sm:$0xff]
    %v317 = vld [vmem:[#allocation2 + $0x808] sm:$0xff]
    %v318 = vld [vmem:[#allocation2 + $0x810] sm:$0xff]
    %v319 = vld [vmem:[#allocation2 + $0x818] sm:$0xff]
    %v320 = vld [vmem:[#allocation2 + $0x820] sm:$0xff]
    %v321 = vld [vmem:[#allocation2 + $0x828] sm:$0xff]
    %v322 = vld [vmem:[#allocation2 + $0x830] sm:$0xff]
    %v323 = vld [vmem:[#allocation2 + $0x838] sm:$0xff]
    %v324 = vld [vmem:[#allocation2 + $0x840] sm:$0xff]
    %v325 = vld [vmem:[#allocation2 + $0x848] sm:$0xff]
    %v326 = vld [vmem:[#allocation2 + $0x850] sm:$0xff]
    %v327 = vld [vmem:[#allocation2 + $0x858] sm:$0xff]
    %v328 = vld [vmem:[#allocation2 + $0x860] sm:$0xff]
    %v329 = vld [vmem:[#allocation2 + $0x868] sm:$0xff]
    %v330 = vld [vmem:[#allocation2 + $0x870] sm:$0xff]
    %v331 = vld [vmem:[#allocation2 + $0x878] sm:$0xff]
    %v332 = vld [vmem:[#allocation2 + $0x880] sm:$0xff]
    %v333 = vld [vmem:[#allocation2 + $0x888] sm:$0xff]
    %v334 = vld [vmem:[#allocation2 + $0x890] sm:$0xff]
    %v335 = vld [vmem:[#allocation2 + $0x898] sm:$0xff]
    %v336 = vld [vmem:[#allocation2 + $0x8a0] sm:$0xff]
    %v337 = vld [vmem:[#allocation2 + $0x8a8] sm:$0xff]
    %v338 = vld [vmem:[#allocation2 + $0x8b0] sm:$0xff]
    %v339 = vld [vmem:[#allocation2 + $0x8b8] sm:$0xff]
    %v340 = vld [vmem:[#allocation2 + $0x8c0] sm:$0xff]
    %v341 = vld [vmem:[#allocation2 + $0x8c8] sm:$0xff]
    %v342 = vld [vmem:[#allocation2 + $0x8d0] sm:$0xff]
    %v343 = vld [vmem:[#allocation2 + $0x8d8] sm:$0xff]
    %v344 = vld [vmem:[#allocation2 + $0x8e0] sm:$0xff]
    %v345 = vld [vmem:[#allocation2 + $0x8e8] sm:$0xff]
    %v346 = vld [vmem:[#allocation2 + $0x8f0] sm:$0xff]
    %v347 = vld [vmem:[#allocation2 + $0x8f8] sm:$0xff]
    %v348 = vld [vmem:[#allocation2 + $0x900] sm:$0xff]
    %v349 = vld [vmem:[#allocation2 + $0x908] sm:$0xff]
    %v350 = vld [vmem:[#allocation2 + $0x910] sm:$0xff]
    %v351 = vld [vmem:[#allocation2 + $0x918] sm:$0xff]
    %v352 = vld [vmem:[#allocation2 + $0x920] sm:$0xff]
    %v353 = vld [vmem:[#allocation2 + $0x928] sm:$0xff]
    %v354 = vld [vmem:[#allocation2 + $0x930] sm:$0xff]
    %v355 = vld [vmem:[#allocation2 + $0x938] sm:$0xff]
    %v356 = vld [vmem:[#allocation2 + $0x940] sm:$0xff]
    %v357 = vld [vmem:[#allocation2 + $0x948] sm:$0xff]
    %v358 = vld [vmem:[#allocation2 + $0x950] sm:$0xff]
    %v359 = vld [vmem:[#allocation2 + $0x958] sm:$0xff]
    %v360 = vld [vmem:[#allocation2 + $0x960] sm:$0xff]
    %v361 = vld [vmem:[#allocation2 + $0x968] sm:$0xff]
    %v362 = vld [vmem:[#allocation2 + $0x970] sm:$0xff]
    %v363 = vld [vmem:[#allocation2 + $0x978] sm:$0xff]
    %v364 = vld [vmem:[#allocation2 + $0x980] sm:$0xff]
    %v365 = vld [vmem:[#allocation2 + $0x988] sm:$0xff]
    %v366 = vld [vmem:[#allocation2 + $0x990] sm:$0xff]
    %v367 = vld [vmem:[#allocation2 + $0x998] sm:$0xff]
    %v368 = vld [vmem:[#allocation2 + $0x9a0] sm:$0xff]
    %v369 = vld [vmem:[#allocation2 + $0x9a8] sm:$0xff]
    %v370 = vld [vmem:[#allocation2 + $0x9b0] sm:$0xff]
    %v371 = vld [vmem:[#allocation2 + $0x9b8] sm:$0xff]
    %v372 = vld [vmem:[#allocation2 + $0x9c0] sm:$0xff]
    %v373 = vld [vmem:[#allocation2 + $0x9c8] sm:$0xff]
    %v374 = vld [vmem:[#allocation2 + $0x9d0] sm:$0xff]
    %v375 = vld [vmem:[#allocation2 + $0x9d8] sm:$0xff]
    %v376 = vld [vmem:[#allocation2 + $0x9e0] sm:$0xff]
    %v377 = vld [vmem:[#allocation2 + $0x9e8] sm:$0xff]
    %v378 = vld [vmem:[#allocation2 + $0x9f0] sm:$0xff]
    %v379 = vld [vmem:[#allocation2 + $0x9f8] sm:$0xff]
    %v380 = vld [vmem:[#allocation2 + $0xa00] sm:$0xff]
    %v381 = vld [vmem:[#allocation2 + $0xa08] sm:$0xff]
    %v382 = vld [vmem:[#allocation2 + $0xa10] sm:$0xff]
    %v383 = vld [vmem:[#allocation2 + $0xa18] sm:$0xff]
    %v384 = vld [vmem:[#allocation2 + $0xa20] sm:$0xff]
    %v385 = vld [vmem:[#allocation2 + $0xa28] sm:$0xff]
    %v386 = vld [vmem:[#allocation2 + $0xa30] sm:$0xff]
    %v387 = vld [vmem:[#allocation2 + $0xa38] sm:$0xff]
    %v388 = vld [vmem:[#allocation2 + $0xa40] sm:$0xff]
    %v389 = vld [vmem:[#allocation2 + $0xa48] sm:$0xff]
    %v390 = vld [vmem:[#allocation2 + $0xa50] sm:$0xff]
    %v391 = vld [vmem:[#allocation2 + $0xa58] sm:$0xff]
    %v392 = vld [vmem:[#allocation2 + $0xa60] sm:$0xff]
    %v393 = vld [vmem:[#allocation2 + $0xa68] sm:$0xff]
    %v394 = vld [vmem:[#allocation2 + $0xa70] sm:$0xff]
    %v395 = vld [vmem:[#allocation2 + $0xa78] sm:$0xff]
    %v396 = vld [vmem:[#allocation2 + $0xa80] sm:$0xff]
    %v397 = vld [vmem:[#allocation2 + $0xa88] sm:$0xff]
    %v398 = vld [vmem:[#allocation2 + $0xa90] sm:$0xff]
    %v399 = vld [vmem:[#allocation2 + $0xa98] sm:$0xff]
    %v400 = vld [vmem:[#allocation2 + $0xaa0] sm:$0xff]
    %v401 = vld [vmem:[#allocation2 + $0xaa8] sm:$0xff]
    %v402 = vld [vmem:[#allocation2 + $0xab0] sm:$0xff]
    %v403 = vld [vmem:[#allocation2 + $0xab8] sm:$0xff]
    %v404 = vld [vmem:[#allocation2 + $0xac0] sm:$0xff]
    %v405 = vld [vmem:[#allocation2 + $0xac8] sm:$0xff]
    %v406 = vld [vmem:[#allocation2 + $0xad0] sm:$0xff]
    %v407 = vld [vmem:[#allocation2 + $0xad8] sm:$0xff]
    %v408 = vld [vmem:[#allocation2 + $0xae0] sm:$0xff]
    %v409 = vld [vmem:[#allocation2 + $0xae8] sm:$0xff]
    %v410 = vld [vmem:[#allocation2 + $0xaf0] sm:$0xff]
    %v411 = vld [vmem:[#allocation2 + $0xaf8] sm:$0xff]
    %v412 = vld [vmem:[#allocation2 + $0xb00] sm:$0xff]
    %v413 = vld [vmem:[#allocation2 + $0xb08] sm:$0xff]
    %v414 = vld [vmem:[#allocation2 + $0xb10] sm:$0xff]
    %v415 = vld [vmem:[#allocation2 + $0xb18] sm:$0xff]
    %v416 = vld [vmem:[#allocation2 + $0xb20] sm:$0xff]
    %v417 = vld [vmem:[#allocation2 + $0xb28] sm:$0xff]
    %v418 = vld [vmem:[#allocation2 + $0xb30] sm:$0xff]
    %v419 = vld [vmem:[#allocation2 + $0xb38] sm:$0xff]
    %v420 = vld [vmem:[#allocation2 + $0xb40] sm:$0xff]
    %v421 = vld [vmem:[#allocation2 + $0xb48] sm:$0xff]
    %v422 = vld [vmem:[#allocation2 + $0xb50] sm:$0xff]
    %v423 = vld [vmem:[#allocation2 + $0xb58] sm:$0xff]
    %v424 = vld [vmem:[#allocation2 + $0xb60] sm:$0xff]
    %v425 = vld [vmem:[#allocation2 + $0xb68] sm:$0xff]
    %v426 = vld [vmem:[#allocation2 + $0xb70] sm:$0xff]
    %v427 = vld [vmem:[#allocation2 + $0xb78] sm:$0xff]
    %v428 = vld [vmem:[#allocation2 + $0xb80] sm:$0xff]
    %v429 = vld [vmem:[#allocation2 + $0xb88] sm:$0xff]
    %v430 = vld [vmem:[#allocation2 + $0xb90] sm:$0xff]
    %v431 = vld [vmem:[#allocation2 + $0xb98] sm:$0xff]
    %v432 = vld [vmem:[#allocation2 + $0xba0] sm:$0xff]
    %v433 = vld [vmem:[#allocation2 + $0xba8] sm:$0xff]
    %v434 = vld [vmem:[#allocation2 + $0xbb0] sm:$0xff]
    %v435 = vld [vmem:[#allocation2 + $0xbb8] sm:$0xff]
    %v436 = vld [vmem:[#allocation2 + $0xbc0] sm:$0xff]
    %v437 = vld [vmem:[#allocation2 + $0xbc8] sm:$0xff]
    %v438 = vld [vmem:[#allocation7] sm:$0xff]
    %v439 = vld [vmem:[#allocation7 + $0x8] sm:$0xff]
    %v440 = vld [vmem:[#allocation7 + $0x10] sm:$0xff]
    %v441 = vld [vmem:[#allocation7 + $0x18] sm:$0xff]
    %v442 = vld [vmem:[#allocation7 + $0x20] sm:$0xff]
    %v443 = vld [vmem:[#allocation7 + $0x28] sm:$0xff]
    %v444 = vld [vmem:[#allocation7 + $0x30] sm:$0xff]
    %v445 = vld [vmem:[#allocation7 + $0x38] sm:$0xff]
    %v446 = vld [vmem:[#allocation7 + $0x40] sm:$0xff]
    %v447 = vld [vmem:[#allocation7 + $0x48] sm:$0xff]
    %v448 = vld [vmem:[#allocation7 + $0x50] sm:$0xff]
    %v449 = vld [vmem:[#allocation7 + $0x58] sm:$0xff]
    %v450 = vld [vmem:[#allocation7 + $0x60] sm:$0xff]
    %v451 = vld [vmem:[#allocation7 + $0x68] sm:$0xff]
    %v452 = vld [vmem:[#allocation7 + $0x70] sm:$0xff]
    %v453 = vld [vmem:[#allocation7 + $0x78] sm:$0xff]
    %v454 = vld [vmem:[#allocation7 + $0x80] sm:$0xff]
    %v455 = vld [vmem:[#allocation7 + $0x88] sm:$0xff]
    %v456 = vld [vmem:[#allocation7 + $0x90] sm:$0xff]
    %v457 = vld [vmem:[#allocation7 + $0x98] sm:$0xff]
    %v458 = vld [vmem:[#allocation7 + $0xa0] sm:$0xff]
    %v459 = vld [vmem:[#allocation7 + $0xa8] sm:$0xff]
    %v460 = vld [vmem:[#allocation7 + $0xb0] sm:$0xff]
    %v461 = vld [vmem:[#allocation7 + $0xb8] sm:$0xff]
    %v462 = vld [vmem:[#allocation7 + $0xc0] sm:$0xff]
    %v463 = vld [vmem:[#allocation7 + $0xc8] sm:$0xff]
    %v464 = vld [vmem:[#allocation7 + $0xd0] sm:$0xff]
    %v465 = vld [vmem:[#allocation7 + $0xd8] sm:$0xff]
    %v466 = vld [vmem:[#allocation7 + $0xe0] sm:$0xff]
    %v467 = vld [vmem:[#allocation7 + $0xe8] sm:$0xff]
    %v468 = vld [vmem:[#allocation7 + $0xf0] sm:$0xff]
    %v469 = vld [vmem:[#allocation7 + $0xf8] sm:$0xff]
    %v470 = vld [vmem:[#allocation7 + $0x100] sm:$0xff]
    %v471 = vld [vmem:[#allocation7 + $0x108] sm:$0xff]
    %v472 = vld [vmem:[#allocation7 + $0x110] sm:$0xff]
    %v473 = vld [vmem:[#allocation7 + $0x118] sm:$0xff]
    %v474 = vld [vmem:[#allocation5] sm:$0xf]
    %v475 = vxor.u32 %v474, 2147483648
    %v476 = vmul.f32 %v475, 1.442695
    %v477 = vpow.pop %v476
    %v478 = vadd.f32 %v477, 1.0
    %v479 = vrcp.pop %v478
    %v480 = vmul.f32 1.0, %v479
    %v482 = vlaneseq
    %v483 = vshrl.u32 %v482, 7
    %v484 = vsub.s32 0, %v483
    %v485 = vrot.slane %v480, %v484
    %v486 = vlaneseq
    %v487 = vshrl.u32 %v486, 7
    %v488 = vsub.s32 1, %v487
    %v489 = vrot.slane %v480, %v488
    %v490 = vlaneseq
    %v491 = vshrl.u32 %v490, 7
    %v492 = vsub.s32 2, %v491
    %v493 = vrot.slane %v480, %v492
    %v494 = vlaneseq
    %v495 = vshrl.u32 %v494, 7
    %v496 = vsub.s32 3, %v495
    %v497 = vrot.slane %v480, %v496
    %v502 = vmul.f32 %v438, %v485
    %v503 = vmul.f32 %v439, %v489
    %v504 = vmul.f32 %v440, %v493
    %v505 = vmul.f32 %v441, %v497
    %v506 = vmul.f32 %v442, %v485
    %v507 = vmul.f32 %v443, %v489
    %v508 = vmul.f32 %v444, %v493
    %v509 = vmul.f32 %v445, %v497
    %v510 = vmul.f32 %v446, %v485
    %v511 = vmul.f32 %v447, %v489
    %v512 = vmul.f32 %v448, %v493
    %v513 = vmul.f32 %v449, %v497
    %v514 = vmul.f32 %v450, %v485
    %v515 = vmul.f32 %v451, %v489
    %v516 = vmul.f32 %v452, %v493
    %v517 = vmul.f32 %v453, %v497
    %v518 = vmul.f32 %v454, %v485
    %v519 = vmul.f32 %v455, %v489
    %v520 = vmul.f32 %v456, %v493
    %v521 = vmul.f32 %v457, %v497
    %v522 = vmul.f32 %v458, %v485
    %v523 = vmul.f32 %v459, %v489
    %v524 = vmul.f32 %v460, %v493
    %v525 = vmul.f32 %v461, %v497
    %v526 = vmul.f32 %v462, %v485
    %v527 = vmul.f32 %v463, %v489
    %v528 = vmul.f32 %v464, %v493
    %v529 = vmul.f32 %v465, %v497
    %v530 = vmul.f32 %v466, %v485
    %v531 = vmul.f32 %v467, %v489
    %v532 = vmul.f32 %v468, %v493
    %v533 = vmul.f32 %v469, %v497
    %v534 = vmul.f32 %v470, %v485
    %v535 = vmul.f32 %v471, %v489
    %v536 = vmul.f32 %v472, %v493
    %v537 = vmul.f32 %v473, %v497
    %vm538 = vcmask 392192
    %v540 = vsel %vm538, %v505, 0
    %v543 = vsel %vm538, %v509, 0
    %v546 = vsel %vm538, %v513, 0
    %v549 = vsel %vm538, %v517, 0
    %v552 = vsel %vm538, %v521, 0
    %v555 = vsel %vm538, %v525, 0
    %v558 = vsel %vm538, %v529, 0
    %v561 = vsel %vm538, %v533, 0
    %v564 = vsel %vm538, %v537, 0
    %566 = vmatprep.subr.mxu0 %v166
    %567 = vmatpush1.msra.mxu0 %v165
    %568 = vmatprep.subr.mxu0 %v159
    %569 = vmatpush1.msra.mxu0 %v158
    %570 = vmatprep.subr.mxu0 %v152
    %571 = vmatpush1.msra.mxu0 %v151
    %572 = vmatprep.subr.mxu0 %v145
    %573 = vmatpush1.msra.mxu0 %v144
    %574 = vmatprep.subr.mxu0 %v138
    %575 = vmatpush1.msra.mxu0 %v137
    %576 = vmatprep.subr.mxu0 %v131
    %577 = vmatpush1.msra.mxu0 %v130
    %578 = vmatprep.subr.mxu0 %v124
    %579 = vmatpush1.msra.mxu0 %v123
    %580 = vmatprep.subr.mxu0 %v117
    %581 = vmatpush1.msra.mxu0 %v116
    %582 = vmatprep.subr.mxu0 %v110
    %583 = vmatpush1.msra.mxu0 %v109
    %584 = vmatprep.subr.mxu0 %v103
    %585 = vmatpush1.msra.mxu0 %v102
    %586 = vmatprep.subr.mxu0 %v96
    %587 = vmatpush1.msra.mxu0 %v95
    %588 = vmatprep.subr.mxu0 %v89
    %589 = vmatpush1.msra.mxu0 %v88
    %590 = vmatprep.subr.mxu0 %v82
    %591 = vmatpush1.msra.mxu0 %v81
    %592 = vmatprep.subr.mxu0 %v75
    %593 = vmatpush1.msra.mxu0 %v74
    %594 = vmatprep.subr.mxu0 %v68
    %595 = vmatpush1.msra.mxu0 %v67
    %596 = vmatprep.subr.mxu0 %v61
    %597 = vmatpush1.msra.mxu0 %v60
    %598 = vmatprep.subr.mxu0 %v278
    %599 = vmatpush2.msra.mxu0 %v277
    %600 = vmatprep.subr.mxu0 %v271
    %601 = vmatpush2.msra.mxu0 %v270
    %602 = vmatprep.subr.mxu0 %v264
    %603 = vmatpush2.msra.mxu0 %v263
    %604 = vmatprep.subr.mxu0 %v257
    %605 = vmatpush2.msra.mxu0 %v256
    %606 = vmatprep.subr.mxu0 %v250
    %607 = vmatpush2.msra.mxu0 %v249
    %608 = vmatprep.subr.mxu0 %v243
    %609 = vmatpush2.msra.mxu0 %v242
    %610 = vmatprep.subr.mxu0 %v236
    %611 = vmatpush2.msra.mxu0 %v235
    %612 = vmatprep.subr.mxu0 %v229
    %613 = vmatpush2.msra.mxu0 %v228
    %614 = vmatprep.subr.mxu0 %v222
    %615 = vmatpush2.msra.mxu0 %v221
    %616 = vmatprep.subr.mxu0 %v215
    %617 = vmatpush2.msra.mxu0 %v214
    %618 = vmatprep.subr.mxu0 %v208
    %619 = vmatpush2.msra.mxu0 %v207
    %620 = vmatprep.subr.mxu0 %v201
    %621 = vmatpush2.msra.mxu0 %v200
    %622 = vmatprep.subr.mxu0 %v194
    %623 = vmatpush2.msra.mxu0 %v193
    %624 = vmatprep.subr.mxu0 %v187
    %625 = vmatpush2.msra.mxu0 %v186
    %626 = vmatprep.subr.mxu0 %v180
    %627 = vmatpush2.msra.mxu0 %v179
    %628 = vmatprep.subr.mxu0 %v173
    %629 = vmatpush2.msra.mxu0 %v172
    %630 = vmatprep.mubr.f32.mxu0 %v503
    %631 = vmatmul.mubr.f32.gmra.mxu0 %v502
    %v632 = vpop.f32.mrf.mxu0
    %v633 = vadd.f32 0.0, %v632
    %v634 = vpop.f32.mrf.mxu0
    %v635 = vadd.f32 0.0, %v634
    %636 = vmatprep.mubr.f32.mxu0 %v507
    %637 = vmatmul.mubr.f32.gmra.mxu0 %v506
    %v638 = vpop.f32.mrf.mxu0
    %v639 = vadd.f32 0.0, %v638
    %v640 = vpop.f32.mrf.mxu0
    %v641 = vadd.f32 0.0, %v640
    %642 = vmatprep.mubr.f32.mxu0 %v511
    %643 = vmatmul.mubr.f32.gmra.mxu0 %v510
    %v644 = vpop.f32.mrf.mxu0
    %v645 = vadd.f32 0.0, %v644
    %v646 = vpop.f32.mrf.mxu0
    %v647 = vadd.f32 0.0, %v646
    %648 = vmatprep.mubr.f32.mxu0 %v515
    %649 = vmatmul.mubr.f32.gmra.mxu0 %v514
    %v650 = vpop.f32.mrf.mxu0
    %v651 = vadd.f32 0.0, %v650
    %v652 = vpop.f32.mrf.mxu0
    %v653 = vadd.f32 0.0, %v652
    %654 = vmatprep.mubr.f32.mxu0 %v519
    %655 = vmatmul.mubr.f32.gmra.mxu0 %v518
    %v656 = vpop.f32.mrf.mxu0
    %v657 = vadd.f32 0.0, %v656
    %v658 = vpop.f32.mrf.mxu0
    %v659 = vadd.f32 0.0, %v658
    %660 = vmatprep.mubr.f32.mxu0 %v523
    %661 = vmatmul.mubr.f32.gmra.mxu0 %v522
    %v662 = vpop.f32.mrf.mxu0
    %v663 = vadd.f32 0.0, %v662
    %v664 = vpop.f32.mrf.mxu0
    %v665 = vadd.f32 0.0, %v664
    %666 = vmatprep.mubr.f32.mxu0 %v527
    %667 = vmatmul.mubr.f32.gmra.mxu0 %v526
    %v668 = vpop.f32.mrf.mxu0
    %v669 = vadd.f32 0.0, %v668
    %v670 = vpop.f32.mrf.mxu0
    %v671 = vadd.f32 0.0, %v670
    %672 = vmatprep.mubr.f32.mxu0 %v531
    %673 = vmatmul.mubr.f32.gmra.mxu0 %v530
    %v674 = vpop.f32.mrf.mxu0
    %v675 = vadd.f32 0.0, %v674
    %v676 = vpop.f32.mrf.mxu0
    %v677 = vadd.f32 0.0, %v676
    %678 = vmatprep.mubr.f32.mxu0 %v535
    %679 = vmatmul.mubr.f32.gmra.mxu0 %v534
    %v680 = vpop.f32.mrf.mxu0
    %v681 = vadd.f32 0.0, %v680
    %v682 = vpop.f32.mrf.mxu0
    %v683 = vadd.f32 0.0, %v682
    %684 = vdwg.mxu0
    %685 = vmatprep.subr.mxu0 %v390
    %686 = vmatpush1.msra.mxu0 %v389
    %687 = vmatprep.subr.mxu0 %v383
    %688 = vmatpush1.msra.mxu0 %v382
    %689 = vmatprep.subr.mxu0 %v376
    %690 = vmatpush1.msra.mxu0 %v375
    %691 = vmatprep.subr.mxu0 %v369
    %692 = vmatpush1.msra.mxu0 %v368
    %693 = vmatprep.subr.mxu0 %v362
    %694 = vmatpush1.msra.mxu0 %v361
    %695 = vmatprep.subr.mxu0 %v355
    %696 = vmatpush1.msra.mxu0 %v354
    %697 = vmatprep.subr.mxu0 %v348
    %698 = vmatpush1.msra.mxu0 %v347
    %699 = vmatprep.subr.mxu0 %v341
    %700 = vmatpush1.msra.mxu0 %v340
    %701 = vmatprep.subr.mxu0 %v334
    %702 = vmatpush1.msra.mxu0 %v333
    %703 = vmatprep.subr.mxu0 %v327
    %704 = vmatpush1.msra.mxu0 %v326
    %705 = vmatprep.subr.mxu0 %v320
    %706 = vmatpush1.msra.mxu0 %v319
    %707 = vmatprep.subr.mxu0 %v313
    %708 = vmatpush1.msra.mxu0 %v312
    %709 = vmatprep.subr.mxu0 %v306
    %710 = vmatpush1.msra.mxu0 %v305
    %711 = vmatprep.subr.mxu0 %v299
    %712 = vmatpush1.msra.mxu0 %v298
    %713 = vmatprep.subr.mxu0 %v292
    %714 = vmatpush1.msra.mxu0 %v291
    %715 = vmatprep.subr.mxu0 %v285
    %716 = vmatpush1.msra.mxu0 %v284
    %717 = vmatprep.subr.mxu0 0.0
    %718 = vmatpush2.msra.mxu0 0.0
    %719 = vmatprep.subr.mxu0 0.0
    %720 = vmatpush2.msra.mxu0 0.0
    %721 = vmatprep.subr.mxu0 0.0
    %722 = vmatpush2.msra.mxu0 0.0
    %723 = vmatprep.subr.mxu0 0.0
    %724 = vmatpush2.msra.mxu0 0.0
    %725 = vmatprep.subr.mxu0 0.0
    %726 = vmatpush2.msra.mxu0 0.0
    %727 = vmatprep.subr.mxu0 0.0
    %728 = vmatpush2.msra.mxu0 0.0
    %729 = vmatprep.subr.mxu0 0.0
    %730 = vmatpush2.msra.mxu0 0.0
    %731 = vmatprep.subr.mxu0 0.0
    %732 = vmatpush2.msra.mxu0 0.0
    %733 = vmatprep.subr.mxu0 0.0
    %734 = vmatpush2.msra.mxu0 0.0
    %735 = vmatprep.subr.mxu0 0.0
    %736 = vmatpush2.msra.mxu0 0.0
    %737 = vmatprep.subr.mxu0 %v432
    %738 = vmatpush2.msra.mxu0 %v431
    %739 = vmatprep.subr.mxu0 %v425
    %740 = vmatpush2.msra.mxu0 %v424
    %741 = vmatprep.subr.mxu0 %v418
    %742 = vmatpush2.msra.mxu0 %v417
    %743 = vmatprep.subr.mxu0 %v411
    %744 = vmatpush2.msra.mxu0 %v410
    %745 = vmatprep.subr.mxu0 %v404
    %746 = vmatpush2.msra.mxu0 %v403
    %747 = vmatprep.subr.mxu0 %v397
    %748 = vmatpush2.msra.mxu0 %v396
    %749 = vmatprep.mubr.f32.mxu0 %v540
    %750 = vmatmul.mubr.f32.gmra.mxu0 %v504
    %v751 = vpop.f32.mrf.mxu0
    %v752 = vadd.f32 %v633, %v751
    %v753 = vpop.f32.mrf.mxu0
    %v754 = vadd.f32 %v635, %v753
    %755 = vmatprep.mubr.f32.mxu0 %v543
    %756 = vmatmul.mubr.f32.gmra.mxu0 %v508
    %v757 = vpop.f32.mrf.mxu0
    %v758 = vadd.f32 %v639, %v757
    %v759 = vpop.f32.mrf.mxu0
    %v760 = vadd.f32 %v641, %v759
    %761 = vmatprep.mubr.f32.mxu0 %v546
    %762 = vmatmul.mubr.f32.gmra.mxu0 %v512
    %v763 = vpop.f32.mrf.mxu0
    %v764 = vadd.f32 %v645, %v763
    %v765 = vpop.f32.mrf.mxu0
    %v766 = vadd.f32 %v647, %v765
    %767 = vmatprep.mubr.f32.mxu0 %v549
    %768 = vmatmul.mubr.f32.gmra.mxu0 %v516
    %v769 = vpop.f32.mrf.mxu0
    %v770 = vadd.f32 %v651, %v769
    %v771 = vpop.f32.mrf.mxu0
    %v772 = vadd.f32 %v653, %v771
    %773 = vmatprep.mubr.f32.mxu0 %v552
    %774 = vmatmul.mubr.f32.gmra.mxu0 %v520
    %v775 = vpop.f32.mrf.mxu0
    %v776 = vadd.f32 %v657, %v775
    %v777 = vpop.f32.mrf.mxu0
    %v778 = vadd.f32 %v659, %v777
    %779 = vmatprep.mubr.f32.mxu0 %v555
    %780 = vmatmul.mubr.f32.gmra.mxu0 %v524
    %v781 = vpop.f32.mrf.mxu0
    %v782 = vadd.f32 %v663, %v781
    %v783 = vpop.f32.mrf.mxu0
    %v784 = vadd.f32 %v665, %v783
    %785 = vmatprep.mubr.f32.mxu0 %v558
    %786 = vmatmul.mubr.f32.gmra.mxu0 %v528
    %v787 = vpop.f32.mrf.mxu0
    %v788 = vadd.f32 %v669, %v787
    %v789 = vpop.f32.mrf.mxu0
    %v790 = vadd.f32 %v671, %v789
    %791 = vmatprep.mubr.f32.mxu0 %v561
    %792 = vmatmul.mubr.f32.gmra.mxu0 %v532
    %v793 = vpop.f32.mrf.mxu0
    %v794 = vadd.f32 %v675, %v793
    %v795 = vpop.f32.mrf.mxu0
    %v796 = vadd.f32 %v677, %v795
    %797 = vmatprep.mubr.f32.mxu0 %v564
    %798 = vmatmul.mubr.f32.gmra.mxu0 %v536
    %v799 = vpop.f32.mrf.mxu0
    %v800 = vadd.f32 %v681, %v799
    %v801 = vpop.f32.mrf.mxu0
    %v802 = vadd.f32 %v683, %v801
    %803 = vdwg.mxu0
    %804 = vmatprep.subr.mxu0 %v168
    %805 = vmatpush1.msra.mxu0 %v167
    %806 = vmatprep.subr.mxu0 %v161
    %807 = vmatpush1.msra.mxu0 %v160
    %808 = vmatprep.subr.mxu0 %v154
    %809 = vmatpush1.msra.mxu0 %v153
    %810 = vmatprep.subr.mxu0 %v147
    %811 = vmatpush1.msra.mxu0 %v146
    %812 = vmatprep.subr.mxu0 %v140
    %813 = vmatpush1.msra.mxu0 %v139
    %814 = vmatprep.subr.mxu0 %v133
    %815 = vmatpush1.msra.mxu0 %v132
    %816 = vmatprep.subr.mxu0 %v126
    %817 = vmatpush1.msra.mxu0 %v125
    %818 = vmatprep.subr.mxu0 %v119
    %819 = vmatpush1.msra.mxu0 %v118
    %820 = vmatprep.subr.mxu0 %v112
    %821 = vmatpush1.msra.mxu0 %v111
    %822 = vmatprep.subr.mxu0 %v105
    %823 = vmatpush1.msra.mxu0 %v104
    %824 = vmatprep.subr.mxu0 %v98
    %825 = vmatpush1.msra.mxu0 %v97
    %826 = vmatprep.subr.mxu0 %v91
    %827 = vmatpush1.msra.mxu0 %v90
    %828 = vmatprep.subr.mxu0 %v84
    %829 = vmatpush1.msra.mxu0 %v83
    %830 = vmatprep.subr.mxu0 %v77
    %831 = vmatpush1.msra.mxu0 %v76
    %832 = vmatprep.subr.mxu0 %v70
    %833 = vmatpush1.msra.mxu0 %v69
    %834 = vmatprep.subr.mxu0 %v63
    %835 = vmatpush1.msra.mxu0 %v62
    %836 = vmatprep.subr.mxu0 %v280
    %837 = vmatpush2.msra.mxu0 %v279
    %838 = vmatprep.subr.mxu0 %v273
    %839 = vmatpush2.msra.mxu0 %v272
    %840 = vmatprep.subr.mxu0 %v266
    %841 = vmatpush2.msra.mxu0 %v265
    %842 = vmatprep.subr.mxu0 %v259
    %843 = vmatpush2.msra.mxu0 %v258
    %844 = vmatprep.subr.mxu0 %v252
    %845 = vmatpush2.msra.mxu0 %v251
    %846 = vmatprep.subr.mxu0 %v245
    %847 = vmatpush2.msra.mxu0 %v244
    %848 = vmatprep.subr.mxu0 %v238
    %849 = vmatpush2.msra.mxu0 %v237
    %850 = vmatprep.subr.mxu0 %v231
    %851 = vmatpush2.msra.mxu0 %v230
    %852 = vmatprep.subr.mxu0 %v224
    %853 = vmatpush2.msra.mxu0 %v223
    %854 = vmatprep.subr.mxu0 %v217
    %855 = vmatpush2.msra.mxu0 %v216
    %856 = vmatprep.subr.mxu0 %v210
    %857 = vmatpush2.msra.mxu0 %v209
    %858 = vmatprep.subr.mxu0 %v203
    %859 = vmatpush2.msra.mxu0 %v202
    %860 = vmatprep.subr.mxu0 %v196
    %861 = vmatpush2.msra.mxu0 %v195
    %862 = vmatprep.subr.mxu0 %v189
    %863 = vmatpush2.msra.mxu0 %v188
    %864 = vmatprep.subr.mxu0 %v182
    %865 = vmatpush2.msra.mxu0 %v181
    %866 = vmatprep.subr.mxu0 %v175
    %867 = vmatpush2.msra.mxu0 %v174
    %868 = vmatprep.mubr.f32.mxu0 %v503
    %869 = vmatmul.mubr.f32.gmra.mxu0 %v502
    %v870 = vpop.f32.mrf.mxu0
    %v871 = vadd.f32 0.0, %v870
    %v872 = vpop.f32.mrf.mxu0
    %v873 = vadd.f32 0.0, %v872
    %874 = vmatprep.mubr.f32.mxu0 %v507
    %875 = vmatmul.mubr.f32.gmra.mxu0 %v506
    %v876 = vpop.f32.mrf.mxu0
    %v877 = vadd.f32 0.0, %v876
    %v878 = vpop.f32.mrf.mxu0
    %v879 = vadd.f32 0.0, %v878
    %880 = vmatprep.mubr.f32.mxu0 %v511
    %881 = vmatmul.mubr.f32.gmra.mxu0 %v510
    %v882 = vpop.f32.mrf.mxu0
    %v883 = vadd.f32 0.0, %v882
    %v884 = vpop.f32.mrf.mxu0
    %v885 = vadd.f32 0.0, %v884
    %886 = vmatprep.mubr.f32.mxu0 %v515
    %887 = vmatmul.mubr.f32.gmra.mxu0 %v514
    %v888 = vpop.f32.mrf.mxu0
    %v889 = vadd.f32 0.0, %v888
    %v890 = vpop.f32.mrf.mxu0
    %v891 = vadd.f32 0.0, %v890
    %892 = vmatprep.mubr.f32.mxu0 %v519
    %893 = vmatmul.mubr.f32.gmra.mxu0 %v518
    %v894 = vpop.f32.mrf.mxu0
    %v895 = vadd.f32 0.0, %v894
    %v896 = vpop.f32.mrf.mxu0
    %v897 = vadd.f32 0.0, %v896
    %898 = vmatprep.mubr.f32.mxu0 %v523
    %899 = vmatmul.mubr.f32.gmra.mxu0 %v522
    %v900 = vpop.f32.mrf.mxu0
    %v901 = vadd.f32 0.0, %v900
    %v902 = vpop.f32.mrf.mxu0
    %v903 = vadd.f32 0.0, %v902
    %904 = vmatprep.mubr.f32.mxu0 %v527
    %905 = vmatmul.mubr.f32.gmra.mxu0 %v526
    %v906 = vpop.f32.mrf.mxu0
    %v907 = vadd.f32 0.0, %v906
    %v908 = vpop.f32.mrf.mxu0
    %v909 = vadd.f32 0.0, %v908
    %910 = vmatprep.mubr.f32.mxu0 %v531
    %911 = vmatmul.mubr.f32.gmra.mxu0 %v530
    %v912 = vpop.f32.mrf.mxu0
    %v913 = vadd.f32 0.0, %v912
    %v914 = vpop.f32.mrf.mxu0
    %v915 = vadd.f32 0.0, %v914
    %916 = vmatprep.mubr.f32.mxu0 %v535
    %917 = vmatmul.mubr.f32.gmra.mxu0 %v534
    %v918 = vpop.f32.mrf.mxu0
    %v919 = vadd.f32 0.0, %v918
    %v920 = vpop.f32.mrf.mxu0
    %v921 = vadd.f32 0.0, %v920
    %922 = vdwg.mxu0
    %923 = vmatprep.subr.mxu0 %v392
    %924 = vmatpush1.msra.mxu0 %v391
    %925 = vmatprep.subr.mxu0 %v385
    %926 = vmatpush1.msra.mxu0 %v384
    %927 = vmatprep.subr.mxu0 %v378
    %928 = vmatpush1.msra.mxu0 %v377
    %929 = vmatprep.subr.mxu0 %v371
    %930 = vmatpush1.msra.mxu0 %v370
    %931 = vmatprep.subr.mxu0 %v364
    %932 = vmatpush1.msra.mxu0 %v363
    %933 = vmatprep.subr.mxu0 %v357
    %934 = vmatpush1.msra.mxu0 %v356
    %935 = vmatprep.subr.mxu0 %v350
    %936 = vmatpush1.msra.mxu0 %v349
    %937 = vmatprep.subr.mxu0 %v343
    %938 = vmatpush1.msra.mxu0 %v342
    %939 = vmatprep.subr.mxu0 %v336
    %940 = vmatpush1.msra.mxu0 %v335
    %941 = vmatprep.subr.mxu0 %v329
    %942 = vmatpush1.msra.mxu0 %v328
    %943 = vmatprep.subr.mxu0 %v322
    %944 = vmatpush1.msra.mxu0 %v321
    %945 = vmatprep.subr.mxu0 %v315
    %946 = vmatpush1.msra.mxu0 %v314
    %947 = vmatprep.subr.mxu0 %v308
    %948 = vmatpush1.msra.mxu0 %v307
    %949 = vmatprep.subr.mxu0 %v301
    %950 = vmatpush1.msra.mxu0 %v300
    %951 = vmatprep.subr.mxu0 %v294
    %952 = vmatpush1.msra.mxu0 %v293
    %953 = vmatprep.subr.mxu0 %v287
    %954 = vmatpush1.msra.mxu0 %v286
    %955 = vmatprep.subr.mxu0 0.0
    %956 = vmatpush2.msra.mxu0 0.0
    %957 = vmatprep.subr.mxu0 0.0
    %958 = vmatpush2.msra.mxu0 0.0
    %959 = vmatprep.subr.mxu0 0.0
    %960 = vmatpush2.msra.mxu0 0.0
    %961 = vmatprep.subr.mxu0 0.0
    %962 = vmatpush2.msra.mxu0 0.0
    %963 = vmatprep.subr.mxu0 0.0
    %964 = vmatpush2.msra.mxu0 0.0
    %965 = vmatprep.subr.mxu0 0.0
    %966 = vmatpush2.msra.mxu0 0.0
    %967 = vmatprep.subr.mxu0 0.0
    %968 = vmatpush2.msra.mxu0 0.0
    %969 = vmatprep.subr.mxu0 0.0
    %970 = vmatpush2.msra.mxu0 0.0
    %971 = vmatprep.subr.mxu0 0.0
    %972 = vmatpush2.msra.mxu0 0.0
    %973 = vmatprep.subr.mxu0 0.0
    %974 = vmatpush2.msra.mxu0 0.0
    %975 = vmatprep.subr.mxu0 %v434
    %976 = vmatpush2.msra.mxu0 %v433
    %977 = vmatprep.subr.mxu0 %v427
    %978 = vmatpush2.msra.mxu0 %v426
    %979 = vmatprep.subr.mxu0 %v420
    %980 = vmatpush2.msra.mxu0 %v419
    %981 = vmatprep.subr.mxu0 %v413
    %982 = vmatpush2.msra.mxu0 %v412
    %983 = vmatprep.subr.mxu0 %v406
    %984 = vmatpush2.msra.mxu0 %v405
    %985 = vmatprep.subr.mxu0 %v399
    %986 = vmatpush2.msra.mxu0 %v398
    %987 = vmatprep.mubr.f32.mxu0 %v540
    %988 = vmatmul.mubr.f32.gmra.mxu0 %v504
    %v989 = vpop.f32.mrf.mxu0
    %v990 = vadd.f32 %v871, %v989
    %v991 = vpop.f32.mrf.mxu0
    %v992 = vadd.f32 %v873, %v991
    %993 = vmatprep.mubr.f32.mxu0 %v543
    %994 = vmatmul.mubr.f32.gmra.mxu0 %v508
    %v995 = vpop.f32.mrf.mxu0
    %v996 = vadd.f32 %v877, %v995
    %v997 = vpop.f32.mrf.mxu0
    %v998 = vadd.f32 %v879, %v997
    %999 = vmatprep.mubr.f32.mxu0 %v546
    %1000 = vmatmul.mubr.f32.gmra.mxu0 %v512
    %v1001 = vpop.f32.mrf.mxu0
    %v1002 = vadd.f32 %v883, %v1001
    %v1003 = vpop.f32.mrf.mxu0
    %v1004 = vadd.f32 %v885, %v1003
    %1005 = vmatprep.mubr.f32.mxu0 %v549
    %1006 = vmatmul.mubr.f32.gmra.mxu0 %v516
    %v1007 = vpop.f32.mrf.mxu0
    %v1008 = vadd.f32 %v889, %v1007
    %v1009 = vpop.f32.mrf.mxu0
    %v1010 = vadd.f32 %v891, %v1009
    %1011 = vmatprep.mubr.f32.mxu0 %v552
    %1012 = vmatmul.mubr.f32.gmra.mxu0 %v520
    %v1013 = vpop.f32.mrf.mxu0
    %v1014 = vadd.f32 %v895, %v1013
    %v1015 = vpop.f32.mrf.mxu0
    %v1016 = vadd.f32 %v897, %v1015
    %1017 = vmatprep.mubr.f32.mxu0 %v555
    %1018 = vmatmul.mubr.f32.gmra.mxu0 %v524
    %v1019 = vpop.f32.mrf.mxu0
    %v1020 = vadd.f32 %v901, %v1019
    %v1021 = vpop.f32.mrf.mxu0
    %v1022 = vadd.f32 %v903, %v1021
    %1023 = vmatprep.mubr.f32.mxu0 %v558
    %1024 = vmatmul.mubr.f32.gmra.mxu0 %v528
    %v1025 = vpop.f32.mrf.mxu0
    %v1026 = vadd.f32 %v907, %v1025
    %v1027 = vpop.f32.mrf.mxu0
    %v1028 = vadd.f32 %v909, %v1027
    %1029 = vmatprep.mubr.f32.mxu0 %v561
    %1030 = vmatmul.mubr.f32.gmra.mxu0 %v532
    %v1031 = vpop.f32.mrf.mxu0
    %v1032 = vadd.f32 %v913, %v1031
    %v1033 = vpop.f32.mrf.mxu0
    %v1034 = vadd.f32 %v915, %v1033
    %1035 = vmatprep.mubr.f32.mxu0 %v564
    %1036 = vmatmul.mubr.f32.gmra.mxu0 %v536
    %v1037 = vpop.f32.mrf.mxu0
    %v1038 = vadd.f32 %v919, %v1037
    %v1039 = vpop.f32.mrf.mxu0
    %v1040 = vadd.f32 %v921, %v1039
    %1041 = vdwg.mxu0
    %1042 = vmatprep.subr.mxu0 %v170
    %1043 = vmatpush1.msra.mxu0 %v169
    %1044 = vmatprep.subr.mxu0 %v163
    %1045 = vmatpush1.msra.mxu0 %v162
    %1046 = vmatprep.subr.mxu0 %v156
    %1047 = vmatpush1.msra.mxu0 %v155
    %1048 = vmatprep.subr.mxu0 %v149
    %1049 = vmatpush1.msra.mxu0 %v148
    %1050 = vmatprep.subr.mxu0 %v142
    %1051 = vmatpush1.msra.mxu0 %v141
    %1052 = vmatprep.subr.mxu0 %v135
    %1053 = vmatpush1.msra.mxu0 %v134
    %1054 = vmatprep.subr.mxu0 %v128
    %1055 = vmatpush1.msra.mxu0 %v127
    %1056 = vmatprep.subr.mxu0 %v121
    %1057 = vmatpush1.msra.mxu0 %v120
    %1058 = vmatprep.subr.mxu0 %v114
    %1059 = vmatpush1.msra.mxu0 %v113
    %1060 = vmatprep.subr.mxu0 %v107
    %1061 = vmatpush1.msra.mxu0 %v106
    %1062 = vmatprep.subr.mxu0 %v100
    %1063 = vmatpush1.msra.mxu0 %v99
    %1064 = vmatprep.subr.mxu0 %v93
    %1065 = vmatpush1.msra.mxu0 %v92
    %1066 = vmatprep.subr.mxu0 %v86
    %1067 = vmatpush1.msra.mxu0 %v85
    %1068 = vmatprep.subr.mxu0 %v79
    %1069 = vmatpush1.msra.mxu0 %v78
    %1070 = vmatprep.subr.mxu0 %v72
    %1071 = vmatpush1.msra.mxu0 %v71
    %1072 = vmatprep.subr.mxu0 %v65
    %1073 = vmatpush1.msra.mxu0 %v64
    %1074 = vmatprep.subr.mxu0 %v282
    %1075 = vmatpush2.msra.mxu0 %v281
    %1076 = vmatprep.subr.mxu0 %v275
    %1077 = vmatpush2.msra.mxu0 %v274
    %1078 = vmatprep.subr.mxu0 %v268
    %1079 = vmatpush2.msra.mxu0 %v267
    %1080 = vmatprep.subr.mxu0 %v261
    %1081 = vmatpush2.msra.mxu0 %v260
    %1082 = vmatprep.subr.mxu0 %v254
    %1083 = vmatpush2.msra.mxu0 %v253
    %1084 = vmatprep.subr.mxu0 %v247
    %1085 = vmatpush2.msra.mxu0 %v246
    %1086 = vmatprep.subr.mxu0 %v240
    %1087 = vmatpush2.msra.mxu0 %v239
    %1088 = vmatprep.subr.mxu0 %v233
    %1089 = vmatpush2.msra.mxu0 %v232
    %1090 = vmatprep.subr.mxu0 %v226
    %1091 = vmatpush2.msra.mxu0 %v225
    %1092 = vmatprep.subr.mxu0 %v219
    %1093 = vmatpush2.msra.mxu0 %v218
    %1094 = vmatprep.subr.mxu0 %v212
    %1095 = vmatpush2.msra.mxu0 %v211
    %1096 = vmatprep.subr.mxu0 %v205
    %1097 = vmatpush2.msra.mxu0 %v204
    %1098 = vmatprep.subr.mxu0 %v198
    %1099 = vmatpush2.msra.mxu0 %v197
    %1100 = vmatprep.subr.mxu0 %v191
    %1101 = vmatpush2.msra.mxu0 %v190
    %1102 = vmatprep.subr.mxu0 %v184
    %1103 = vmatpush2.msra.mxu0 %v183
    %1104 = vmatprep.subr.mxu0 %v177
    %1105 = vmatpush2.msra.mxu0 %v176
    %1106 = vmatprep.mubr.f32.mxu0 %v503
    %1107 = vmatmul.mubr.f32.gmra.mxu0 %v502
    %v1108 = vpop.f32.mrf.mxu0
    %v1109 = vadd.f32 0.0, %v1108
    %v1110 = vpop.f32.mrf.mxu0
    %v1111 = vadd.f32 0.0, %v1110
    %1112 = vmatprep.mubr.f32.mxu0 %v507
    %1113 = vmatmul.mubr.f32.gmra.mxu0 %v506
    %v1114 = vpop.f32.mrf.mxu0
    %v1115 = vadd.f32 0.0, %v1114
    %v1116 = vpop.f32.mrf.mxu0
    %v1117 = vadd.f32 0.0, %v1116
    %1118 = vmatprep.mubr.f32.mxu0 %v511
    %1119 = vmatmul.mubr.f32.gmra.mxu0 %v510
    %v1120 = vpop.f32.mrf.mxu0
    %v1121 = vadd.f32 0.0, %v1120
    %v1122 = vpop.f32.mrf.mxu0
    %v1123 = vadd.f32 0.0, %v1122
    %1124 = vmatprep.mubr.f32.mxu0 %v515
    %1125 = vmatmul.mubr.f32.gmra.mxu0 %v514
    %v1126 = vpop.f32.mrf.mxu0
    %v1127 = vadd.f32 0.0, %v1126
    %v1128 = vpop.f32.mrf.mxu0
    %v1129 = vadd.f32 0.0, %v1128
    %1130 = vmatprep.mubr.f32.mxu0 %v519
    %1131 = vmatmul.mubr.f32.gmra.mxu0 %v518
    %v1132 = vpop.f32.mrf.mxu0
    %v1133 = vadd.f32 0.0, %v1132
    %v1134 = vpop.f32.mrf.mxu0
    %v1135 = vadd.f32 0.0, %v1134
    %1136 = vmatprep.mubr.f32.mxu0 %v523
    %1137 = vmatmul.mubr.f32.gmra.mxu0 %v522
    %v1138 = vpop.f32.mrf.mxu0
    %v1139 = vadd.f32 0.0, %v1138
    %v1140 = vpop.f32.mrf.mxu0
    %v1141 = vadd.f32 0.0, %v1140
    %1142 = vmatprep.mubr.f32.mxu0 %v527
    %1143 = vmatmul.mubr.f32.gmra.mxu0 %v526
    %v1144 = vpop.f32.mrf.mxu0
    %v1145 = vadd.f32 0.0, %v1144
    %v1146 = vpop.f32.mrf.mxu0
    %v1147 = vadd.f32 0.0, %v1146
    %1148 = vmatprep.mubr.f32.mxu0 %v531
    %1149 = vmatmul.mubr.f32.gmra.mxu0 %v530
    %v1150 = vpop.f32.mrf.mxu0
    %v1151 = vadd.f32 0.0, %v1150
    %v1152 = vpop.f32.mrf.mxu0
    %v1153 = vadd.f32 0.0, %v1152
    %1154 = vmatprep.mubr.f32.mxu0 %v535
    %1155 = vmatmul.mubr.f32.gmra.mxu0 %v534
    %v1156 = vpop.f32.mrf.mxu0
    %v1157 = vadd.f32 0.0, %v1156
    %v1158 = vpop.f32.mrf.mxu0
    %v1159 = vadd.f32 0.0, %v1158
    %1160 = vdwg.mxu0
    %1161 = vmatprep.subr.mxu0 %v394
    %1162 = vmatpush1.msra.mxu0 %v393
    %1163 = vmatprep.subr.mxu0 %v387
    %1164 = vmatpush1.msra.mxu0 %v386
    %1165 = vmatprep.subr.mxu0 %v380
    %1166 = vmatpush1.msra.mxu0 %v379
    %1167 = vmatprep.subr.mxu0 %v373
    %1168 = vmatpush1.msra.mxu0 %v372
    %1169 = vmatprep.subr.mxu0 %v366
    %1170 = vmatpush1.msra.mxu0 %v365
    %1171 = vmatprep.subr.mxu0 %v359
    %1172 = vmatpush1.msra.mxu0 %v358
    %1173 = vmatprep.subr.mxu0 %v352
    %1174 = vmatpush1.msra.mxu0 %v351
    %1175 = vmatprep.subr.mxu0 %v345
    %1176 = vmatpush1.msra.mxu0 %v344
    %1177 = vmatprep.subr.mxu0 %v338
    %1178 = vmatpush1.msra.mxu0 %v337
    %1179 = vmatprep.subr.mxu0 %v331
    %1180 = vmatpush1.msra.mxu0 %v330
    %1181 = vmatprep.subr.mxu0 %v324
    %1182 = vmatpush1.msra.mxu0 %v323
    %1183 = vmatprep.subr.mxu0 %v317
    %1184 = vmatpush1.msra.mxu0 %v316
    %1185 = vmatprep.subr.mxu0 %v310
    %1186 = vmatpush1.msra.mxu0 %v309
    %1187 = vmatprep.subr.mxu0 %v303
    %1188 = vmatpush1.msra.mxu0 %v302
    %1189 = vmatprep.subr.mxu0 %v296
    %1190 = vmatpush1.msra.mxu0 %v295
    %1191 = vmatprep.subr.mxu0 %v289
    %1192 = vmatpush1.msra.mxu0 %v288
    %1193 = vmatprep.subr.mxu0 0.0
    %1194 = vmatpush2.msra.mxu0 0.0
    %1195 = vmatprep.subr.mxu0 0.0
    %1196 = vmatpush2.msra.mxu0 0.0
    %1197 = vmatprep.subr.mxu0 0.0
    %1198 = vmatpush2.msra.mxu0 0.0
    %1199 = vmatprep.subr.mxu0 0.0
    %1200 = vmatpush2.msra.mxu0 0.0
    %1201 = vmatprep.subr.mxu0 0.0
    %1202 = vmatpush2.msra.mxu0 0.0
    %1203 = vmatprep.subr.mxu0 0.0
    %1204 = vmatpush2.msra.mxu0 0.0
    %1205 = vmatprep.subr.mxu0 0.0
    %1206 = vmatpush2.msra.mxu0 0.0
    %1207 = vmatprep.subr.mxu0 0.0
    %1208 = vmatpush2.msra.mxu0 0.0
    %1209 = vmatprep.subr.mxu0 0.0
    %1210 = vmatpush2.msra.mxu0 0.0
    %1211 = vmatprep.subr.mxu0 0.0
    %1212 = vmatpush2.msra.mxu0 0.0
    %1213 = vmatprep.subr.mxu0 %v436
    %1214 = vmatpush2.msra.mxu0 %v435
    %1215 = vmatprep.subr.mxu0 %v429
    %1216 = vmatpush2.msra.mxu0 %v428
    %1217 = vmatprep.subr.mxu0 %v422
    %1218 = vmatpush2.msra.mxu0 %v421
    %1219 = vmatprep.subr.mxu0 %v415
    %1220 = vmatpush2.msra.mxu0 %v414
    %1221 = vmatprep.subr.mxu0 %v408
    %1222 = vmatpush2.msra.mxu0 %v407
    %1223 = vmatprep.subr.mxu0 %v401
    %1224 = vmatpush2.msra.mxu0 %v400
    %1225 = vmatprep.mubr.f32.mxu0 %v540
    %1226 = vmatmul.mubr.f32.gmra.mxu0 %v504
    %v1227 = vpop.f32.mrf.mxu0
    %v1228 = vadd.f32 %v1109, %v1227
    %v1229 = vpop.f32.mrf.mxu0
    %v1230 = vadd.f32 %v1111, %v1229
    %1231 = vmatprep.mubr.f32.mxu0 %v543
    %1232 = vmatmul.mubr.f32.gmra.mxu0 %v508
    %v1233 = vpop.f32.mrf.mxu0
    %v1234 = vadd.f32 %v1115, %v1233
    %v1235 = vpop.f32.mrf.mxu0
    %v1236 = vadd.f32 %v1117, %v1235
    %1237 = vmatprep.mubr.f32.mxu0 %v546
    %1238 = vmatmul.mubr.f32.gmra.mxu0 %v512
    %v1239 = vpop.f32.mrf.mxu0
    %v1240 = vadd.f32 %v1121, %v1239
    %v1241 = vpop.f32.mrf.mxu0
    %v1242 = vadd.f32 %v1123, %v1241
    %1243 = vmatprep.mubr.f32.mxu0 %v549
    %1244 = vmatmul.mubr.f32.gmra.mxu0 %v516
    %v1245 = vpop.f32.mrf.mxu0
    %v1246 = vadd.f32 %v1127, %v1245
    %v1247 = vpop.f32.mrf.mxu0
    %v1248 = vadd.f32 %v1129, %v1247
    %1249 = vmatprep.mubr.f32.mxu0 %v552
    %1250 = vmatmul.mubr.f32.gmra.mxu0 %v520
    %v1251 = vpop.f32.mrf.mxu0
    %v1252 = vadd.f32 %v1133, %v1251
    %v1253 = vpop.f32.mrf.mxu0
    %v1254 = vadd.f32 %v1135, %v1253
    %1255 = vmatprep.mubr.f32.mxu0 %v555
    %1256 = vmatmul.mubr.f32.gmra.mxu0 %v524
    %v1257 = vpop.f32.mrf.mxu0
    %v1258 = vadd.f32 %v1139, %v1257
    %v1259 = vpop.f32.mrf.mxu0
    %v1260 = vadd.f32 %v1141, %v1259
    %1261 = vmatprep.mubr.f32.mxu0 %v558
    %1262 = vmatmul.mubr.f32.gmra.mxu0 %v528
    %v1263 = vpop.f32.mrf.mxu0
    %v1264 = vadd.f32 %v1145, %v1263
    %v1265 = vpop.f32.mrf.mxu0
    %v1266 = vadd.f32 %v1147, %v1265
    %1267 = vmatprep.mubr.f32.mxu0 %v561
    %1268 = vmatmul.mubr.f32.gmra.mxu0 %v532
    %v1269 = vpop.f32.mrf.mxu0
    %v1270 = vadd.f32 %v1151, %v1269
    %v1271 = vpop.f32.mrf.mxu0
    %v1272 = vadd.f32 %v1153, %v1271
    %1273 = vmatprep.mubr.f32.mxu0 %v564
    %1274 = vmatmul.mubr.f32.gmra.mxu0 %v536
    %v1275 = vpop.f32.mrf.mxu0
    %v1276 = vadd.f32 %v1157, %v1275
    %v1277 = vpop.f32.mrf.mxu0
    %v1278 = vadd.f32 %v1159, %v1277
    %1279 = vdwg.mxu0
    %1280 = vmatprep.subr.mxu0 0.0
    %1281 = vmatpush1.msra.mxu0 %v171
    %1282 = vmatprep.subr.mxu0 0.0
    %1283 = vmatpush1.msra.mxu0 %v164
    %1284 = vmatprep.subr.mxu0 0.0
    %1285 = vmatpush1.msra.mxu0 %v157
    %1286 = vmatprep.subr.mxu0 0.0
    %1287 = vmatpush1.msra.mxu0 %v150
    %1288 = vmatprep.subr.mxu0 0.0
    %1289 = vmatpush1.msra.mxu0 %v143
    %1290 = vmatprep.subr.mxu0 0.0
    %1291 = vmatpush1.msra.mxu0 %v136
    %1292 = vmatprep.subr.mxu0 0.0
    %1293 = vmatpush1.msra.mxu0 %v129
    %1294 = vmatprep.subr.mxu0 0.0
    %1295 = vmatpush1.msra.mxu0 %v122
    %1296 = vmatprep.subr.mxu0 0.0
    %1297 = vmatpush1.msra.mxu0 %v115
    %1298 = vmatprep.subr.mxu0 0.0
    %1299 = vmatpush1.msra.mxu0 %v108
    %1300 = vmatprep.subr.mxu0 0.0
    %1301 = vmatpush1.msra.mxu0 %v101
    %1302 = vmatprep.subr.mxu0 0.0
    %1303 = vmatpush1.msra.mxu0 %v94
    %1304 = vmatprep.subr.mxu0 0.0
    %1305 = vmatpush1.msra.mxu0 %v87
    %1306 = vmatprep.subr.mxu0 0.0
    %1307 = vmatpush1.msra.mxu0 %v80
    %1308 = vmatprep.subr.mxu0 0.0
    %1309 = vmatpush1.msra.mxu0 %v73
    %1310 = vmatprep.subr.mxu0 0.0
    %1311 = vmatpush1.msra.mxu0 %v66
    %1312 = vmatprep.subr.mxu0 0.0
    %1313 = vmatpush2.msra.mxu0 %v283
    %1314 = vmatprep.subr.mxu0 0.0
    %1315 = vmatpush2.msra.mxu0 %v276
    %1316 = vmatprep.subr.mxu0 0.0
    %1317 = vmatpush2.msra.mxu0 %v269
    %1318 = vmatprep.subr.mxu0 0.0
    %1319 = vmatpush2.msra.mxu0 %v262
    %1320 = vmatprep.subr.mxu0 0.0
    %1321 = vmatpush2.msra.mxu0 %v255
    %1322 = vmatprep.subr.mxu0 0.0
    %1323 = vmatpush2.msra.mxu0 %v248
    %1324 = vmatprep.subr.mxu0 0.0
    %1325 = vmatpush2.msra.mxu0 %v241
    %1326 = vmatprep.subr.mxu0 0.0
    %1327 = vmatpush2.msra.mxu0 %v234
    %1328 = vmatprep.subr.mxu0 0.0
    %1329 = vmatpush2.msra.mxu0 %v227
    %1330 = vmatprep.subr.mxu0 0.0
    %1331 = vmatpush2.msra.mxu0 %v220
    %1332 = vmatprep.subr.mxu0 0.0
    %1333 = vmatpush2.msra.mxu0 %v213
    %1334 = vmatprep.subr.mxu0 0.0
    %1335 = vmatpush2.msra.mxu0 %v206
    %1336 = vmatprep.subr.mxu0 0.0
    %1337 = vmatpush2.msra.mxu0 %v199
    %1338 = vmatprep.subr.mxu0 0.0
    %1339 = vmatpush2.msra.mxu0 %v192
    %1340 = vmatprep.subr.mxu0 0.0
    %1341 = vmatpush2.msra.mxu0 %v185
    %1342 = vmatprep.subr.mxu0 0.0
    %1343 = vmatpush2.msra.mxu0 %v178
    %1344 = vmatprep.mubr.f32.mxu0 %v503
    %1345 = vmatmul.mubr.f32.gmra.mxu0 %v502
    %v1346 = vpop.f32.mrf.mxu0
    %v1347 = vadd.f32 0.0, %v1346
    %v1348 = vpop.f32.mrf.mxu0
    %1349 = vmatprep.mubr.f32.mxu0 %v507
    %1350 = vmatmul.mubr.f32.gmra.mxu0 %v506
    %v1351 = vpop.f32.mrf.mxu0
    %v1352 = vadd.f32 0.0, %v1351
    %v1353 = vpop.f32.mrf.mxu0
    %1354 = vmatprep.mubr.f32.mxu0 %v511
    %1355 = vmatmul.mubr.f32.gmra.mxu0 %v510
    %v1356 = vpop.f32.mrf.mxu0
    %v1357 = vadd.f32 0.0, %v1356
    %v1358 = vpop.f32.mrf.mxu0
    %1359 = vmatprep.mubr.f32.mxu0 %v515
    %1360 = vmatmul.mubr.f32.gmra.mxu0 %v514
    %v1361 = vpop.f32.mrf.mxu0
    %v1362 = vadd.f32 0.0, %v1361
    %v1363 = vpop.f32.mrf.mxu0
    %1364 = vmatprep.mubr.f32.mxu0 %v519
    %1365 = vmatmul.mubr.f32.gmra.mxu0 %v518
    %v1366 = vpop.f32.mrf.mxu0
    %v1367 = vadd.f32 0.0, %v1366
    %v1368 = vpop.f32.mrf.mxu0
    %1369 = vmatprep.mubr.f32.mxu0 %v523
    %1370 = vmatmul.mubr.f32.gmra.mxu0 %v522
    %v1371 = vpop.f32.mrf.mxu0
    %v1372 = vadd.f32 0.0, %v1371
    %v1373 = vpop.f32.mrf.mxu0
    %1374 = vmatprep.mubr.f32.mxu0 %v527
    %1375 = vmatmul.mubr.f32.gmra.mxu0 %v526
    %v1376 = vpop.f32.mrf.mxu0
    %v1377 = vadd.f32 0.0, %v1376
    %v1378 = vpop.f32.mrf.mxu0
    %1379 = vmatprep.mubr.f32.mxu0 %v531
    %1380 = vmatmul.mubr.f32.gmra.mxu0 %v530
    %v1381 = vpop.f32.mrf.mxu0
    %v1382 = vadd.f32 0.0, %v1381
    %v1383 = vpop.f32.mrf.mxu0
    %1384 = vmatprep.mubr.f32.mxu0 %v535
    %1385 = vmatmul.mubr.f32.gmra.mxu0 %v534
    %v1386 = vpop.f32.mrf.mxu0
    %v1387 = vadd.f32 0.0, %v1386
    %v1388 = vpop.f32.mrf.mxu0
    %1389 = vdwg.mxu0
    %1390 = vmatprep.subr.mxu0 0.0
    %1391 = vmatpush1.msra.mxu0 %v395
    %1392 = vmatprep.subr.mxu0 0.0
    %1393 = vmatpush1.msra.mxu0 %v388
    %1394 = vmatprep.subr.mxu0 0.0
    %1395 = vmatpush1.msra.mxu0 %v381
    %1396 = vmatprep.subr.mxu0 0.0
    %1397 = vmatpush1.msra.mxu0 %v374
    %1398 = vmatprep.subr.mxu0 0.0
    %1399 = vmatpush1.msra.mxu0 %v367
    %1400 = vmatprep.subr.mxu0 0.0
    %1401 = vmatpush1.msra.mxu0 %v360
    %1402 = vmatprep.subr.mxu0 0.0
    %1403 = vmatpush1.msra.mxu0 %v353
    %1404 = vmatprep.subr.mxu0 0.0
    %1405 = vmatpush1.msra.mxu0 %v346
    %1406 = vmatprep.subr.mxu0 0.0
    %1407 = vmatpush1.msra.mxu0 %v339
    %1408 = vmatprep.subr.mxu0 0.0
    %1409 = vmatpush1.msra.mxu0 %v332
    %1410 = vmatprep.subr.mxu0 0.0
    %1411 = vmatpush1.msra.mxu0 %v325
    %1412 = vmatprep.subr.mxu0 0.0
    %1413 = vmatpush1.msra.mxu0 %v318
    %1414 = vmatprep.subr.mxu0 0.0
    %1415 = vmatpush1.msra.mxu0 %v311
    %1416 = vmatprep.subr.mxu0 0.0
    %1417 = vmatpush1.msra.mxu0 %v304
    %1418 = vmatprep.subr.mxu0 0.0
    %1419 = vmatpush1.msra.mxu0 %v297
    %1420 = vmatprep.subr.mxu0 0.0
    %1421 = vmatpush1.msra.mxu0 %v290
    %1422 = vmatprep.subr.mxu0 0.0
    %1423 = vmatpush2.msra.mxu0 0.0
    %1424 = vmatprep.subr.mxu0 0.0
    %1425 = vmatpush2.msra.mxu0 0.0
    %1426 = vmatprep.subr.mxu0 0.0
    %1427 = vmatpush2.msra.mxu0 0.0
    %1428 = vmatprep.subr.mxu0 0.0
    %1429 = vmatpush2.msra.mxu0 0.0
    %1430 = vmatprep.subr.mxu0 0.0
    %1431 = vmatpush2.msra.mxu0 0.0
    %1432 = vmatprep.subr.mxu0 0.0
    %1433 = vmatpush2.msra.mxu0 0.0
    %1434 = vmatprep.subr.mxu0 0.0
    %1435 = vmatpush2.msra.mxu0 0.0
    %1436 = vmatprep.subr.mxu0 0.0
    %1437 = vmatpush2.msra.mxu0 0.0
    %1438 = vmatprep.subr.mxu0 0.0
    %1439 = vmatpush2.msra.mxu0 0.0
    %1440 = vmatprep.subr.mxu0 0.0
    %1441 = vmatpush2.msra.mxu0 0.0
    %1442 = vmatprep.subr.mxu0 0.0
    %1443 = vmatpush2.msra.mxu0 %v437
    %1444 = vmatprep.subr.mxu0 0.0
    %1445 = vmatpush2.msra.mxu0 %v430
    %1446 = vmatprep.subr.mxu0 0.0
    %1447 = vmatpush2.msra.mxu0 %v423
    %1448 = vmatprep.subr.mxu0 0.0
    %1449 = vmatpush2.msra.mxu0 %v416
    %1450 = vmatprep.subr.mxu0 0.0
    %1451 = vmatpush2.msra.mxu0 %v409
    %1452 = vmatprep.subr.mxu0 0.0
    %1453 = vmatpush2.msra.mxu0 %v402
    %1454 = vmatprep.mubr.f32.mxu0 %v540
    %1455 = vmatmul.mubr.f32.gmra.mxu0 %v504
    %v1456 = vpop.f32.mrf.mxu0
    %v1457 = vadd.f32 %v1347, %v1456
    %v1458 = vpop.f32.mrf.mxu0
    %1459 = vmatprep.mubr.f32.mxu0 %v543
    %1460 = vmatmul.mubr.f32.gmra.mxu0 %v508
    %v1461 = vpop.f32.mrf.mxu0
    %v1462 = vadd.f32 %v1352, %v1461
    %v1463 = vpop.f32.mrf.mxu0
    %1464 = vmatprep.mubr.f32.mxu0 %v546
    %1465 = vmatmul.mubr.f32.gmra.mxu0 %v512
    %v1466 = vpop.f32.mrf.mxu0
    %v1467 = vadd.f32 %v1357, %v1466
    %v1468 = vpop.f32.mrf.mxu0
    %1469 = vmatprep.mubr.f32.mxu0 %v549
    %1470 = vmatmul.mubr.f32.gmra.mxu0 %v516
    %v1471 = vpop.f32.mrf.mxu0
    %v1472 = vadd.f32 %v1362, %v1471
    %v1473 = vpop.f32.mrf.mxu0
    %1474 = vmatprep.mubr.f32.mxu0 %v552
    %1475 = vmatmul.mubr.f32.gmra.mxu0 %v520
    %v1476 = vpop.f32.mrf.mxu0
    %v1477 = vadd.f32 %v1367, %v1476
    %v1478 = vpop.f32.mrf.mxu0
    %1479 = vmatprep.mubr.f32.mxu0 %v555
    %1480 = vmatmul.mubr.f32.gmra.mxu0 %v524
    %v1481 = vpop.f32.mrf.mxu0
    %v1482 = vadd.f32 %v1372, %v1481
    %v1483 = vpop.f32.mrf.mxu0
    %1484 = vmatprep.mubr.f32.mxu0 %v558
    %1485 = vmatmul.mubr.f32.gmra.mxu0 %v528
    %v1486 = vpop.f32.mrf.mxu0
    %v1487 = vadd.f32 %v1377, %v1486
    %v1488 = vpop.f32.mrf.mxu0
    %1489 = vmatprep.mubr.f32.mxu0 %v561
    %1490 = vmatmul.mubr.f32.gmra.mxu0 %v532
    %v1491 = vpop.f32.mrf.mxu0
    %v1492 = vadd.f32 %v1382, %v1491
    %v1493 = vpop.f32.mrf.mxu0
    %1494 = vmatprep.mubr.f32.mxu0 %v564
    %1495 = vmatmul.mubr.f32.gmra.mxu0 %v536
    %v1496 = vpop.f32.mrf.mxu0
    %v1497 = vadd.f32 %v1387, %v1496
    %v1498 = vpop.f32.mrf.mxu0
    %1499 = vdwg.mxu0
    %v1500 = vadd.f32 %v752, %v754
    %v1501 = vadd.f32 %v1500, %v990
    %v1502 = vadd.f32 %v1501, %v992
    %v1503 = vadd.f32 %v1502, %v1228
    %v1504 = vadd.f32 %v1503, %v1230
    %vm1505 = vcmask 130048
    %v1506 = vsel %vm1505, %v1457, 0.0
    %v1507 = vadd.f32 %v1504, %v1506
    %1508 = vadd.xlane.f32.xlu0 %v1507
    %v1509 = vpop.xlane.xlu0 %1508
    %v1510 = vadd.f32 %v758, %v760
    %v1511 = vadd.f32 %v1510, %v996
    %v1512 = vadd.f32 %v1511, %v998
    %v1513 = vadd.f32 %v1512, %v1234
    %v1514 = vadd.f32 %v1513, %v1236
    %v1515 = vsel %vm1505, %v1462, 0.0
    %v1516 = vadd.f32 %v1514, %v1515
    %1517 = vadd.xlane.f32.xlu0 %v1516
    %v1518 = vpop.xlane.xlu0 %1517
    %v1519 = vadd.f32 %v764, %v766
    %v1520 = vadd.f32 %v1519, %v1002
    %v1521 = vadd.f32 %v1520, %v1004
    %v1522 = vadd.f32 %v1521, %v1240
    %v1523 = vadd.f32 %v1522, %v1242
    %v1524 = vsel %vm1505, %v1467, 0.0
    %v1525 = vadd.f32 %v1523, %v1524
    %1526 = vadd.xlane.f32.xlu0 %v1525
    %v1527 = vpop.xlane.xlu0 %1526
    %v1528 = vadd.f32 %v770, %v772
    %v1529 = vadd.f32 %v1528, %v1008
    %v1530 = vadd.f32 %v1529, %v1010
    %v1531 = vadd.f32 %v1530, %v1246
    %v1532 = vadd.f32 %v1531, %v1248
    %v1533 = vsel %vm1505, %v1472, 0.0
    %v1534 = vadd.f32 %v1532, %v1533
    %1535 = vadd.xlane.f32.xlu0 %v1534
    %v1536 = vpop.xlane.xlu0 %1535
    %v1537 = vadd.f32 %v776, %v778
    %v1538 = vadd.f32 %v1537, %v1014
    %v1539 = vadd.f32 %v1538, %v1016
    %v1540 = vadd.f32 %v1539, %v1252
    %v1541 = vadd.f32 %v1540, %v1254
    %v1542 = vsel %vm1505, %v1477, 0.0
    %v1543 = vadd.f32 %v1541, %v1542
    %1544 = vadd.xlane.f32.xlu0 %v1543
    %v1545 = vpop.xlane.xlu0 %1544
    %v1546 = vadd.f32 %v782, %v784
    %v1547 = vadd.f32 %v1546, %v1020
    %v1548 = vadd.f32 %v1547, %v1022
    %v1549 = vadd.f32 %v1548, %v1258
    %v1550 = vadd.f32 %v1549, %v1260
    %v1551 = vsel %vm1505, %v1482, 0.0
    %v1552 = vadd.f32 %v1550, %v1551
    %1553 = vadd.xlane.f32.xlu0 %v1552
    %v1554 = vpop.xlane.xlu0 %1553
    %v1555 = vadd.f32 %v788, %v790
    %v1556 = vadd.f32 %v1555, %v1026
    %v1557 = vadd.f32 %v1556, %v1028
    %v1558 = vadd.f32 %v1557, %v1264
    %v1559 = vadd.f32 %v1558, %v1266
    %v1560 = vsel %vm1505, %v1487, 0.0
    %v1561 = vadd.f32 %v1559, %v1560
    %1562 = vadd.xlane.f32.xlu0 %v1561
    %v1563 = vpop.xlane.xlu0 %1562
    %v1564 = vadd.f32 %v794, %v796
    %v1565 = vadd.f32 %v1564, %v1032
    %v1566 = vadd.f32 %v1565, %v1034
    %v1567 = vadd.f32 %v1566, %v1270
    %v1568 = vadd.f32 %v1567, %v1272
    %v1569 = vsel %vm1505, %v1492, 0.0
    %v1570 = vadd.f32 %v1568, %v1569
    %1571 = vadd.xlane.f32.xlu0 %v1570
    %v1572 = vpop.xlane.xlu0 %1571
    %v1573 = vadd.f32 %v800, %v802
    %v1574 = vadd.f32 %v1573, %v1038
    %v1575 = vadd.f32 %v1574, %v1040
    %v1576 = vadd.f32 %v1575, %v1276
    %v1577 = vadd.f32 %v1576, %v1278
    %v1578 = vsel %vm1505, %v1497, 0.0
    %v1579 = vadd.f32 %v1577, %v1578
    %1580 = vadd.xlane.f32.xlu0 %v1579
    %v1581 = vpop.xlane.xlu0 %1580
    %v1582 = vmul.f32 %v1509, 0.0012755102
    %v1583 = vmul.f32 %v1518, 0.0012755102
    %v1584 = vmul.f32 %v1527, 0.0012755102
    %v1585 = vmul.f32 %v1536, 0.0012755102
    %v1586 = vmul.f32 %v1545, 0.0012755102
    %v1587 = vmul.f32 %v1554, 0.0012755102
    %v1588 = vmul.f32 %v1563, 0.0012755102
    %v1589 = vmul.f32 %v1572, 0.0012755102
    %v1590 = vmul.f32 %v1581, 0.0012755102
    %v1591 = vsub.f32 %v752, %v1582
    %v1592 = vsub.f32 %v754, %v1582
    %v1593 = vsub.f32 %v990, %v1582
    %v1594 = vsub.f32 %v992, %v1582
    %v1595 = vsub.f32 %v1228, %v1582
    %v1596 = vsub.f32 %v1230, %v1582
    %v1597 = vsub.f32 %v1457, %v1582
    %v1598 = vsub.f32 %v758, %v1583
    %v1599 = vsub.f32 %v760, %v1583
    %v1600 = vsub.f32 %v996, %v1583
    %v1601 = vsub.f32 %v998, %v1583
    %v1602 = vsub.f32 %v1234, %v1583
    %v1603 = vsub.f32 %v1236, %v1583
    %v1604 = vsub.f32 %v1462, %v1583
    %v1605 = vsub.f32 %v764, %v1584
    %v1606 = vsub.f32 %v766, %v1584
    %v1607 = vsub.f32 %v1002, %v1584
    %v1608 = vsub.f32 %v1004, %v1584
    %v1609 = vsub.f32 %v1240, %v1584
    %v1610 = vsub.f32 %v1242, %v1584
    %v1611 = vsub.f32 %v1467, %v1584
    %v1612 = vsub.f32 %v770, %v1585
    %v1613 = vsub.f32 %v772, %v1585
    %v1614 = vsub.f32 %v1008, %v1585
    %v1615 = vsub.f32 %v1010, %v1585
    %v1616 = vsub.f32 %v1246, %v1585
    %v1617 = vsub.f32 %v1248, %v1585
    %v1618 = vsub.f32 %v1472, %v1585
    %v1619 = vsub.f32 %v776, %v1586
    %v1620 = vsub.f32 %v778, %v1586
    %v1621 = vsub.f32 %v1014, %v1586
    %v1622 = vsub.f32 %v1016, %v1586
    %v1623 = vsub.f32 %v1252, %v1586
    %v1624 = vsub.f32 %v1254, %v1586
    %v1625 = vsub.f32 %v1477, %v1586
    %v1626 = vsub.f32 %v782, %v1587
    %v1627 = vsub.f32 %v784, %v1587
    %v1628 = vsub.f32 %v1020, %v1587
    %v1629 = vsub.f32 %v1022, %v1587
    %v1630 = vsub.f32 %v1258, %v1587
    %v1631 = vsub.f32 %v1260, %v1587
    %v1632 = vsub.f32 %v1482, %v1587
    %v1633 = vsub.f32 %v788, %v1588
    %v1634 = vsub.f32 %v790, %v1588
    %v1635 = vsub.f32 %v1026, %v1588
    %v1636 = vsub.f32 %v1028, %v1588
    %v1637 = vsub.f32 %v1264, %v1588
    %v1638 = vsub.f32 %v1266, %v1588
    %v1639 = vsub.f32 %v1487, %v1588
    %v1640 = vsub.f32 %v794, %v1589
    %v1641 = vsub.f32 %v796, %v1589
    %v1642 = vsub.f32 %v1032, %v1589
    %v1643 = vsub.f32 %v1034, %v1589
    %v1644 = vsub.f32 %v1270, %v1589
    %v1645 = vsub.f32 %v1272, %v1589
    %v1646 = vsub.f32 %v1492, %v1589
    %v1647 = vsub.f32 %v800, %v1590
    %v1648 = vsub.f32 %v802, %v1590
    %v1649 = vsub.f32 %v1038, %v1590
    %v1650 = vsub.f32 %v1040, %v1590
    %v1651 = vsub.f32 %v1276, %v1590
    %v1652 = vsub.f32 %v1278, %v1590
    %v1653 = vsub.f32 %v1497, %v1590
    %v1654 = vmul.f32 %v1591, %v1591
    %v1655 = vmul.f32 %v1592, %v1592
    %v1656 = vmul.f32 %v1593, %v1593
    %v1657 = vmul.f32 %v1594, %v1594
    %v1658 = vmul.f32 %v1595, %v1595
    %v1659 = vmul.f32 %v1596, %v1596
    %v1660 = vmul.f32 %v1597, %v1597
    %v1661 = vmul.f32 %v1598, %v1598
    %v1662 = vmul.f32 %v1599, %v1599
    %v1663 = vmul.f32 %v1600, %v1600
    %v1664 = vmul.f32 %v1601, %v1601
    %v1665 = vmul.f32 %v1602, %v1602
    %v1666 = vmul.f32 %v1603, %v1603
    %v1667 = vmul.f32 %v1604, %v1604
    %v1668 = vmul.f32 %v1605, %v1605
    %v1669 = vmul.f32 %v1606, %v1606
    %v1670 = vmul.f32 %v1607, %v1607
    %v1671 = vmul.f32 %v1608, %v1608
    %v1672 = vmul.f32 %v1609, %v1609
    %v1673 = vmul.f32 %v1610, %v1610
    %v1674 = vmul.f32 %v1611, %v1611
    %v1675 = vmul.f32 %v1612, %v1612
    %v1676 = vmul.f32 %v1613, %v1613
    %v1677 = vmul.f32 %v1614, %v1614
    %v1678 = vmul.f32 %v1615, %v1615
    %v1679 = vmul.f32 %v1616, %v1616
    %v1680 = vmul.f32 %v1617, %v1617
    %v1681 = vmul.f32 %v1618, %v1618
    %v1682 = vmul.f32 %v1619, %v1619
    %v1683 = vmul.f32 %v1620, %v1620
    %v1684 = vmul.f32 %v1621, %v1621
    %v1685 = vmul.f32 %v1622, %v1622
    %v1686 = vmul.f32 %v1623, %v1623
    %v1687 = vmul.f32 %v1624, %v1624
    %v1688 = vmul.f32 %v1625, %v1625
    %v1689 = vmul.f32 %v1626, %v1626
    %v1690 = vmul.f32 %v1627, %v1627
    %v1691 = vmul.f32 %v1628, %v1628
    %v1692 = vmul.f32 %v1629, %v1629
    %v1693 = vmul.f32 %v1630, %v1630
    %v1694 = vmul.f32 %v1631, %v1631
    %v1695 = vmul.f32 %v1632, %v1632
    %v1696 = vmul.f32 %v1633, %v1633
    %v1697 = vmul.f32 %v1634, %v1634
    %v1698 = vmul.f32 %v1635, %v1635
    %v1699 = vmul.f32 %v1636, %v1636
    %v1700 = vmul.f32 %v1637, %v1637
    %v1701 = vmul.f32 %v1638, %v1638
    %v1702 = vmul.f32 %v1639, %v1639
    %v1703 = vmul.f32 %v1640, %v1640
    %v1704 = vmul.f32 %v1641, %v1641
    %v1705 = vmul.f32 %v1642, %v1642
    %v1706 = vmul.f32 %v1643, %v1643
    %v1707 = vmul.f32 %v1644, %v1644
    %v1708 = vmul.f32 %v1645, %v1645
    %v1709 = vmul.f32 %v1646, %v1646
    %v1710 = vmul.f32 %v1647, %v1647
    %v1711 = vmul.f32 %v1648, %v1648
    %v1712 = vmul.f32 %v1649, %v1649
    %v1713 = vmul.f32 %v1650, %v1650
    %v1714 = vmul.f32 %v1651, %v1651
    %v1715 = vmul.f32 %v1652, %v1652
    %v1716 = vmul.f32 %v1653, %v1653
    %v1717 = vadd.f32 %v1654, %v1655
    %v1718 = vadd.f32 %v1717, %v1656
    %v1719 = vadd.f32 %v1718, %v1657
    %v1720 = vadd.f32 %v1719, %v1658
    %v1721 = vadd.f32 %v1720, %v1659
    %v1722 = vsel %vm1505, %v1660, 0.0
    %v1723 = vadd.f32 %v1721, %v1722
    %1724 = vadd.xlane.f32.xlu0 %v1723
    %v1725 = vpop.xlane.xlu0 %1724
    %v1726 = vadd.f32 %v1661, %v1662
    %v1727 = vadd.f32 %v1726, %v1663
    %v1728 = vadd.f32 %v1727, %v1664
    %v1729 = vadd.f32 %v1728, %v1665
    %v1730 = vadd.f32 %v1729, %v1666
    %v1731 = vsel %vm1505, %v1667, 0.0
    %v1732 = vadd.f32 %v1730, %v1731
    %1733 = vadd.xlane.f32.xlu0 %v1732
    %v1734 = vpop.xlane.xlu0 %1733
    %v1735 = vadd.f32 %v1668, %v1669
    %v1736 = vadd.f32 %v1735, %v1670
    %v1737 = vadd.f32 %v1736, %v1671
    %v1738 = vadd.f32 %v1737, %v1672
    %v1739 = vadd.f32 %v1738, %v1673
    %v1740 = vsel %vm1505, %v1674, 0.0
    %v1741 = vadd.f32 %v1739, %v1740
    %1742 = vadd.xlane.f32.xlu0 %v1741
    %v1743 = vpop.xlane.xlu0 %1742
    %v1744 = vadd.f32 %v1675, %v1676
    %v1745 = vadd.f32 %v1744, %v1677
    %v1746 = vadd.f32 %v1745, %v1678
    %v1747 = vadd.f32 %v1746, %v1679
    %v1748 = vadd.f32 %v1747, %v1680
    %v1749 = vsel %vm1505, %v1681, 0.0
    %v1750 = vadd.f32 %v1748, %v1749
    %1751 = vadd.xlane.f32.xlu0 %v1750
    %v1752 = vpop.xlane.xlu0 %1751
    %v1753 = vadd.f32 %v1682, %v1683
    %v1754 = vadd.f32 %v1753, %v1684
    %v1755 = vadd.f32 %v1754, %v1685
    %v1756 = vadd.f32 %v1755, %v1686
    %v1757 = vadd.f32 %v1756, %v1687
    %v1758 = vsel %vm1505, %v1688, 0.0
    %v1759 = vadd.f32 %v1757, %v1758
    %1760 = vadd.xlane.f32.xlu0 %v1759
    %v1761 = vpop.xlane.xlu0 %1760
    %v1762 = vadd.f32 %v1689, %v1690
    %v1763 = vadd.f32 %v1762, %v1691
    %v1764 = vadd.f32 %v1763, %v1692
    %v1765 = vadd.f32 %v1764, %v1693
    %v1766 = vadd.f32 %v1765, %v1694
    %v1767 = vsel %vm1505, %v1695, 0.0
    %v1768 = vadd.f32 %v1766, %v1767
    %1769 = vadd.xlane.f32.xlu0 %v1768
    %v1770 = vpop.xlane.xlu0 %1769
    %v1771 = vadd.f32 %v1696, %v1697
    %v1772 = vadd.f32 %v1771, %v1698
    %v1773 = vadd.f32 %v1772, %v1699
    %v1774 = vadd.f32 %v1773, %v1700
    %v1775 = vadd.f32 %v1774, %v1701
    %v1776 = vsel %vm1505, %v1702, 0.0
    %v1777 = vadd.f32 %v1775, %v1776
    %1778 = vadd.xlane.f32.xlu0 %v1777
    %v1779 = vpop.xlane.xlu0 %1778
    %v1780 = vadd.f32 %v1703, %v1704
    %v1781 = vadd.f32 %v1780, %v1705
    %v1782 = vadd.f32 %v1781, %v1706
    %v1783 = vadd.f32 %v1782, %v1707
    %v1784 = vadd.f32 %v1783, %v1708
    %v1785 = vsel %vm1505, %v1709, 0.0
    %v1786 = vadd.f32 %v1784, %v1785
    %1787 = vadd.xlane.f32.xlu0 %v1786
    %v1788 = vpop.xlane.xlu0 %1787
    %v1789 = vadd.f32 %v1710, %v1711
    %v1790 = vadd.f32 %v1789, %v1712
    %v1791 = vadd.f32 %v1790, %v1713
    %v1792 = vadd.f32 %v1791, %v1714
    %v1793 = vadd.f32 %v1792, %v1715
    %v1794 = vsel %vm1505, %v1716, 0.0
    %v1795 = vadd.f32 %v1793, %v1794
    %1796 = vadd.xlane.f32.xlu0 %v1795
    %v1797 = vpop.xlane.xlu0 %1796
    %v1798 = vmul.f32 %v1725, 0.0012755102
    %v1799 = vmul.f32 %v1734, 0.0012755102
    %v1800 = vmul.f32 %v1743, 0.0012755102
    %v1801 = vmul.f32 %v1752, 0.0012755102
    %v1802 = vmul.f32 %v1761, 0.0012755102
    %v1803 = vmul.f32 %v1770, 0.0012755102
    %v1804 = vmul.f32 %v1779, 0.0012755102
    %v1805 = vmul.f32 %v1788, 0.0012755102
    %v1806 = vmul.f32 %v1797, 0.0012755102
    %v1807 = vadd.f32 %v1798, 1e-05
    %v1808 = vadd.f32 %v1799, 1e-05
    %v1809 = vadd.f32 %v1800, 1e-05
    %v1810 = vadd.f32 %v1801, 1e-05
    %v1811 = vadd.f32 %v1802, 1e-05
    %v1812 = vadd.f32 %v1803, 1e-05
    %v1813 = vadd.f32 %v1804, 1e-05
    %v1814 = vadd.f32 %v1805, 1e-05
    %v1815 = vadd.f32 %v1806, 1e-05
    %v1816 = vrsqrt.pop %v1807
    %v1817 = vrsqrt.pop %v1808
    %v1818 = vrsqrt.pop %v1809
    %v1819 = vrsqrt.pop %v1810
    %v1820 = vrsqrt.pop %v1811
    %v1821 = vrsqrt.pop %v1812
    %v1822 = vrsqrt.pop %v1813
    %v1823 = vrsqrt.pop %v1814
    %v1824 = vrsqrt.pop %v1815
    %v1825 = vld [vmem:[%s3] sm:$0xff]
    %v1826 = vld [vmem:[%s3 + $0x8] sm:$0xff]
    %v1827 = vld [vmem:[%s3 + $0x10] sm:$0xff]
    %v1828 = vld [vmem:[%s3 + $0x18] sm:$0xff]
    %v1829 = vld [vmem:[%s3 + $0x20] sm:$0xff]
    %v1830 = vld [vmem:[%s3 + $0x28] sm:$0xff]
    %v1831 = vld [vmem:[%s3 + $0x30] sm:$0xff]
    %v1832 = vld [vmem:[%s3 + $0x38] sm:$0xff]
    %v1833 = vld [vmem:[%s3 + $0x40] sm:$0xff]
    %v1834 = vmul.f32 %v1825, %v1816
    %v1835 = vmul.f32 %v1826, %v1817
    %v1836 = vmul.f32 %v1827, %v1818
    %v1837 = vmul.f32 %v1828, %v1819
    %v1838 = vmul.f32 %v1829, %v1820
    %v1839 = vmul.f32 %v1830, %v1821
    %v1840 = vmul.f32 %v1831, %v1822
    %v1841 = vmul.f32 %v1832, %v1823
    %v1842 = vmul.f32 %v1833, %v1824
    %1844 = vset.pattern.permute.xlu0 0
    %1845 = vperm.xlu0 %1844, %v1834
    %v1846 = vpop.permute.xlu0 %1845
    %1849 = vset.pattern.permute.xlu0 0
    %1850 = vperm.xlu0 %1849, %v1835
    %v1851 = vpop.permute.xlu0 %1850
    %1854 = vset.pattern.permute.xlu0 0
    %1855 = vperm.xlu0 %1854, %v1836
    %v1856 = vpop.permute.xlu0 %1855
    %1859 = vset.pattern.permute.xlu0 0
    %1860 = vperm.xlu0 %1859, %v1837
    %v1861 = vpop.permute.xlu0 %1860
    %1864 = vset.pattern.permute.xlu0 0
    %1865 = vperm.xlu0 %1864, %v1838
    %v1866 = vpop.permute.xlu0 %1865
    %1869 = vset.pattern.permute.xlu0 0
    %1870 = vperm.xlu0 %1869, %v1839
    %v1871 = vpop.permute.xlu0 %1870
    %1874 = vset.pattern.permute.xlu0 0
    %1875 = vperm.xlu0 %1874, %v1840
    %v1876 = vpop.permute.xlu0 %1875
    %1879 = vset.pattern.permute.xlu0 0
    %1880 = vperm.xlu0 %1879, %v1841
    %v1881 = vpop.permute.xlu0 %1880
    %1884 = vset.pattern.permute.xlu0 0
    %1885 = vperm.xlu0 %1884, %v1842
    %v1886 = vpop.permute.xlu0 %1885
    %v1888 = vmul.f32 %v1591, %v1846
    %v1889 = vmul.f32 %v1592, %v1846
    %v1890 = vmul.f32 %v1593, %v1846
    %v1891 = vmul.f32 %v1594, %v1846
    %v1892 = vmul.f32 %v1595, %v1846
    %v1893 = vmul.f32 %v1596, %v1846
    %v1894 = vmul.f32 %v1597, %v1846
    %v1895 = vmul.f32 %v1598, %v1851
    %v1896 = vmul.f32 %v1599, %v1851
    %v1897 = vmul.f32 %v1600, %v1851
    %v1898 = vmul.f32 %v1601, %v1851
    %v1899 = vmul.f32 %v1602, %v1851
    %v1900 = vmul.f32 %v1603, %v1851
    %v1901 = vmul.f32 %v1604, %v1851
    %v1902 = vmul.f32 %v1605, %v1856
    %v1903 = vmul.f32 %v1606, %v1856
    %v1904 = vmul.f32 %v1607, %v1856
    %v1905 = vmul.f32 %v1608, %v1856
    %v1906 = vmul.f32 %v1609, %v1856
    %v1907 = vmul.f32 %v1610, %v1856
    %v1908 = vmul.f32 %v1611, %v1856
    %v1909 = vmul.f32 %v1612, %v1861
    %v1910 = vmul.f32 %v1613, %v1861
    %v1911 = vmul.f32 %v1614, %v1861
    %v1912 = vmul.f32 %v1615, %v1861
    %v1913 = vmul.f32 %v1616, %v1861
    %v1914 = vmul.f32 %v1617, %v1861
    %v1915 = vmul.f32 %v1618, %v1861
    %v1916 = vmul.f32 %v1619, %v1866
    %v1917 = vmul.f32 %v1620, %v1866
    %v1918 = vmul.f32 %v1621, %v1866
    %v1919 = vmul.f32 %v1622, %v1866
    %v1920 = vmul.f32 %v1623, %v1866
    %v1921 = vmul.f32 %v1624, %v1866
    %v1922 = vmul.f32 %v1625, %v1866
    %v1923 = vmul.f32 %v1626, %v1871
    %v1924 = vmul.f32 %v1627, %v1871
    %v1925 = vmul.f32 %v1628, %v1871
    %v1926 = vmul.f32 %v1629, %v1871
    %v1927 = vmul.f32 %v1630, %v1871
    %v1928 = vmul.f32 %v1631, %v1871
    %v1929 = vmul.f32 %v1632, %v1871
    %v1930 = vmul.f32 %v1633, %v1876
    %v1931 = vmul.f32 %v1634, %v1876
    %v1932 = vmul.f32 %v1635, %v1876
    %v1933 = vmul.f32 %v1636, %v1876
    %v1934 = vmul.f32 %v1637, %v1876
    %v1935 = vmul.f32 %v1638, %v1876
    %v1936 = vmul.f32 %v1639, %v1876
    %v1937 = vmul.f32 %v1640, %v1881
    %v1938 = vmul.f32 %v1641, %v1881
    %v1939 = vmul.f32 %v1642, %v1881
    %v1940 = vmul.f32 %v1643, %v1881
    %v1941 = vmul.f32 %v1644, %v1881
    %v1942 = vmul.f32 %v1645, %v1881
    %v1943 = vmul.f32 %v1646, %v1881
    %v1944 = vmul.f32 %v1647, %v1886
    %v1945 = vmul.f32 %v1648, %v1886
    %v1946 = vmul.f32 %v1649, %v1886
    %v1947 = vmul.f32 %v1650, %v1886
    %v1948 = vmul.f32 %v1651, %v1886
    %v1949 = vmul.f32 %v1652, %v1886
    %v1950 = vmul.f32 %v1653, %v1886
    %v1951 = vld [vmem:[%s4] sm:$0xff]
    %v1952 = vld [vmem:[%s4 + $0x8] sm:$0xff]
    %v1953 = vld [vmem:[%s4 + $0x10] sm:$0xff]
    %v1954 = vld [vmem:[%s4 + $0x18] sm:$0xff]
    %v1955 = vld [vmem:[%s4 + $0x20] sm:$0xff]
    %v1956 = vld [vmem:[%s4 + $0x28] sm:$0xff]
    %v1957 = vld [vmem:[%s4 + $0x30] sm:$0xff]
    %v1958 = vld [vmem:[%s4 + $0x38] sm:$0xff]
    %v1959 = vld [vmem:[%s4 + $0x40] sm:$0xff]
    %1961 = vset.pattern.permute.xlu0 0
    %1962 = vperm.xlu0 %1961, %v1951
    %v1963 = vpop.permute.xlu0 %1962
    %1966 = vset.pattern.permute.xlu0 0
    %1967 = vperm.xlu0 %1966, %v1952
    %v1968 = vpop.permute.xlu0 %1967
    %1971 = vset.pattern.permute.xlu0 0
    %1972 = vperm.xlu0 %1971, %v1953
    %v1973 = vpop.permute.xlu0 %1972
    %1976 = vset.pattern.permute.xlu0 0
    %1977 = vperm.xlu0 %1976, %v1954
    %v1978 = vpop.permute.xlu0 %1977
    %1981 = vset.pattern.permute.xlu0 0
    %1982 = vperm.xlu0 %1981, %v1955
    %v1983 = vpop.permute.xlu0 %1982
    %1986 = vset.pattern.permute.xlu0 0
    %1987 = vperm.xlu0 %1986, %v1956
    %v1988 = vpop.permute.xlu0 %1987
    %1991 = vset.pattern.permute.xlu0 0
    %1992 = vperm.xlu0 %1991, %v1957
    %v1993 = vpop.permute.xlu0 %1992
    %1996 = vset.pattern.permute.xlu0 0
    %1997 = vperm.xlu0 %1996, %v1958
    %v1998 = vpop.permute.xlu0 %1997
    %2001 = vset.pattern.permute.xlu0 0
    %2002 = vperm.xlu0 %2001, %v1959
    %v2003 = vpop.permute.xlu0 %2002
    %v2005 = vadd.f32 %v1888, %v1963
    %v2006 = vadd.f32 %v1889, %v1963
    %v2007 = vadd.f32 %v1890, %v1963
    %v2008 = vadd.f32 %v1891, %v1963
    %v2009 = vadd.f32 %v1892, %v1963
    %v2010 = vadd.f32 %v1893, %v1963
    %v2011 = vadd.f32 %v1894, %v1963
    %v2012 = vadd.f32 %v1895, %v1968
    %v2013 = vadd.f32 %v1896, %v1968
    %v2014 = vadd.f32 %v1897, %v1968
    %v2015 = vadd.f32 %v1898, %v1968
    %v2016 = vadd.f32 %v1899, %v1968
    %v2017 = vadd.f32 %v1900, %v1968
    %v2018 = vadd.f32 %v1901, %v1968
    %v2019 = vadd.f32 %v1902, %v1973
    %v2020 = vadd.f32 %v1903, %v1973
    %v2021 = vadd.f32 %v1904, %v1973
    %v2022 = vadd.f32 %v1905, %v1973
    %v2023 = vadd.f32 %v1906, %v1973
    %v2024 = vadd.f32 %v1907, %v1973
    %v2025 = vadd.f32 %v1908, %v1973
    %v2026 = vadd.f32 %v1909, %v1978
    %v2027 = vadd.f32 %v1910, %v1978
    %v2028 = vadd.f32 %v1911, %v1978
    %v2029 = vadd.f32 %v1912, %v1978
    %v2030 = vadd.f32 %v1913, %v1978
    %v2031 = vadd.f32 %v1914, %v1978
    %v2032 = vadd.f32 %v1915, %v1978
    %v2033 = vadd.f32 %v1916, %v1983
    %v2034 = vadd.f32 %v1917, %v1983
    %v2035 = vadd.f32 %v1918, %v1983
    %v2036 = vadd.f32 %v1919, %v1983
    %v2037 = vadd.f32 %v1920, %v1983
    %v2038 = vadd.f32 %v1921, %v1983
    %v2039 = vadd.f32 %v1922, %v1983
    %v2040 = vadd.f32 %v1923, %v1988
    %v2041 = vadd.f32 %v1924, %v1988
    %v2042 = vadd.f32 %v1925, %v1988
    %v2043 = vadd.f32 %v1926, %v1988
    %v2044 = vadd.f32 %v1927, %v1988
    %v2045 = vadd.f32 %v1928, %v1988
    %v2046 = vadd.f32 %v1929, %v1988
    %v2047 = vadd.f32 %v1930, %v1993
    %v2048 = vadd.f32 %v1931, %v1993
    %v2049 = vadd.f32 %v1932, %v1993
    %v2050 = vadd.f32 %v1933, %v1993
    %v2051 = vadd.f32 %v1934, %v1993
    %v2052 = vadd.f32 %v1935, %v1993
    %v2053 = vadd.f32 %v1936, %v1993
    %v2054 = vadd.f32 %v1937, %v1998
    %v2055 = vadd.f32 %v1938, %v1998
    %v2056 = vadd.f32 %v1939, %v1998
    %v2057 = vadd.f32 %v1940, %v1998
    %v2058 = vadd.f32 %v1941, %v1998
    %v2059 = vadd.f32 %v1942, %v1998
    %v2060 = vadd.f32 %v1943, %v1998
    %v2061 = vadd.f32 %v1944, %v2003
    %v2062 = vadd.f32 %v1945, %v2003
    %v2063 = vadd.f32 %v1946, %v2003
    %v2064 = vadd.f32 %v1947, %v2003
    %v2065 = vadd.f32 %v1948, %v2003
    %v2066 = vadd.f32 %v1949, %v2003
    %v2067 = vadd.f32 %v1950, %v2003
    %2068 = vst [vmem:[#allocation8] sm:$0xff] %v2005
    %2069 = vst [vmem:[#allocation8 + $0x8] sm:$0xff] %v2006
    %2070 = vst [vmem:[#allocation8 + $0x10] sm:$0xff] %v2007
    %2071 = vst [vmem:[#allocation8 + $0x18] sm:$0xff] %v2008
    %2072 = vst [vmem:[#allocation8 + $0x20] sm:$0xff] %v2009
    %2073 = vst [vmem:[#allocation8 + $0x28] sm:$0xff] %v2010
    %2074 = vst.msk [vmem:[#allocation8 + $0x30] sm:$0xff] %vm1505, %v2011
    %2075 = vst [vmem:[#allocation8 + $0x38] sm:$0xff] %v2012
    %2076 = vst [vmem:[#allocation8 + $0x40] sm:$0xff] %v2013
    %2077 = vst [vmem:[#allocation8 + $0x48] sm:$0xff] %v2014
    %2078 = vst [vmem:[#allocation8 + $0x50] sm:$0xff] %v2015
    %2079 = vst [vmem:[#allocation8 + $0x58] sm:$0xff] %v2016
    %2080 = vst [vmem:[#allocation8 + $0x60] sm:$0xff] %v2017
    %2081 = vst.msk [vmem:[#allocation8 + $0x68] sm:$0xff] %vm1505, %v2018
    %2082 = vst [vmem:[#allocation8 + $0x70] sm:$0xff] %v2019
    %2083 = vst [vmem:[#allocation8 + $0x78] sm:$0xff] %v2020
    %2084 = vst [vmem:[#allocation8 + $0x80] sm:$0xff] %v2021
    %2085 = vst [vmem:[#allocation8 + $0x88] sm:$0xff] %v2022
    %2086 = vst [vmem:[#allocation8 + $0x90] sm:$0xff] %v2023
    %2087 = vst [vmem:[#allocation8 + $0x98] sm:$0xff] %v2024
    %2088 = vst.msk [vmem:[#allocation8 + $0xa0] sm:$0xff] %vm1505, %v2025
    %2089 = vst [vmem:[#allocation8 + $0xa8] sm:$0xff] %v2026
    %2090 = vst [vmem:[#allocation8 + $0xb0] sm:$0xff] %v2027
    %2091 = vst [vmem:[#allocation8 + $0xb8] sm:$0xff] %v2028
    %2092 = vst [vmem:[#allocation8 + $0xc0] sm:$0xff] %v2029
    %2093 = vst [vmem:[#allocation8 + $0xc8] sm:$0xff] %v2030
    %2094 = vst [vmem:[#allocation8 + $0xd0] sm:$0xff] %v2031
    %2095 = vst.msk [vmem:[#allocation8 + $0xd8] sm:$0xff] %vm1505, %v2032
    %2096 = vst [vmem:[#allocation8 + $0xe0] sm:$0xff] %v2033
    %2097 = vst [vmem:[#allocation8 + $0xe8] sm:$0xff] %v2034
    %2098 = vst [vmem:[#allocation8 + $0xf0] sm:$0xff] %v2035
    %2099 = vst [vmem:[#allocation8 + $0xf8] sm:$0xff] %v2036
    %2100 = vst [vmem:[#allocation8 + $0x100] sm:$0xff] %v2037
    %2101 = vst [vmem:[#allocation8 + $0x108] sm:$0xff] %v2038
    %2102 = vst.msk [vmem:[#allocation8 + $0x110] sm:$0xff] %vm1505, %v2039
    %2103 = vst [vmem:[#allocation8 + $0x118] sm:$0xff] %v2040
    %2104 = vst [vmem:[#allocation8 + $0x120] sm:$0xff] %v2041
    %2105 = vst [vmem:[#allocation8 + $0x128] sm:$0xff] %v2042
    %2106 = vst [vmem:[#allocation8 + $0x130] sm:$0xff] %v2043
    %2107 = vst [vmem:[#allocation8 + $0x138] sm:$0xff] %v2044
    %2108 = vst [vmem:[#allocation8 + $0x140] sm:$0xff] %v2045
    %2109 = vst.msk [vmem:[#allocation8 + $0x148] sm:$0xff] %vm1505, %v2046
    %2110 = vst [vmem:[#allocation8 + $0x150] sm:$0xff] %v2047
    %2111 = vst [vmem:[#allocation8 + $0x158] sm:$0xff] %v2048
    %2112 = vst [vmem:[#allocation8 + $0x160] sm:$0xff] %v2049
    %2113 = vst [vmem:[#allocation8 + $0x168] sm:$0xff] %v2050
    %2114 = vst [vmem:[#allocation8 + $0x170] sm:$0xff] %v2051
    %2115 = vst [vmem:[#allocation8 + $0x178] sm:$0xff] %v2052
    %2116 = vst.msk [vmem:[#allocation8 + $0x180] sm:$0xff] %vm1505, %v2053
    %2117 = vst [vmem:[#allocation8 + $0x188] sm:$0xff] %v2054
    %2118 = vst [vmem:[#allocation8 + $0x190] sm:$0xff] %v2055
    %2119 = vst [vmem:[#allocation8 + $0x198] sm:$0xff] %v2056
    %2120 = vst [vmem:[#allocation8 + $0x1a0] sm:$0xff] %v2057
    %2121 = vst [vmem:[#allocation8 + $0x1a8] sm:$0xff] %v2058
    %2122 = vst [vmem:[#allocation8 + $0x1b0] sm:$0xff] %v2059
    %2123 = vst.msk [vmem:[#allocation8 + $0x1b8] sm:$0xff] %vm1505, %v2060
    %2124 = vst [vmem:[#allocation8 + $0x1c0] sm:$0xff] %v2061
    %2125 = vst [vmem:[#allocation8 + $0x1c8] sm:$0xff] %v2062
    %2126 = vst [vmem:[#allocation8 + $0x1d0] sm:$0xff] %v2063
    %2127 = vst [vmem:[#allocation8 + $0x1d8] sm:$0xff] %v2064
    %2128 = vst [vmem:[#allocation8 + $0x1e0] sm:$0xff] %v2065
    %2129 = vst [vmem:[#allocation8 + $0x1e8] sm:$0xff] %v2066
    %2130 = vst.msk [vmem:[#allocation8 + $0x1f0] sm:$0xff] %vm1505, %v2067
    // Predicated region
    $region34: #{tpu_custom_call.1} parent=1 // pred_check
      _
    $region35: #{tpu_custom_call.1} parent=1 // pred_check_branch
      %2132 = sbr.rel (0) target = $region37
    $region36: #{tpu_custom_call.1} parent=1 // pred_region
      %s2134 = ssub.s32 8064, 8064
      %2135 = vsyncadd [#allocation4], %s2134
      %s2136 = sshll.u32 [#allocation8], 4
      %s2137 = int_to_ptr.vmem [resolvable:$true] %s2136
      %2142 = dma.vmem_to_hbm [thread:$0]  %s2137, 8064, %s5, [#allocation4], 896, 896, 56
    $region37: #{tpu_custom_call.1} parent=1 // pred_fallthru
      _
    // Predicated region
    $region38: #{tpu_custom_call.1} parent=1 // pred_check
      _
    $region39: #{tpu_custom_call.1} parent=1 // pred_check_branch
      %2144 = sbr.rel (0) target = $region41
    $region40: #{tpu_custom_call.1} parent=1 // pred_region
      %2145 = dma.done [#allocation4], 8064
    $region41: #{tpu_custom_call.1} parent=1 // pred_fallthru
      _
    %2146 = vsyncpa [#allocation3], 1
    %2147 = vsyncpa [#allocation6], 1
    %2148 = vsyncpa [#allocation4], 1

</llo_original>
